<compile_context>
chip_gen: v7x
topology: tpu7x:2x2x1
jax: 0.10.0
libtpu: 0.0.40
codegen_flags: <defaults>
</compile_context>

<pallas_src>
import functools

import jax
import jax.numpy as jnp
from jax.experimental import pallas as pl
from jax.experimental.pallas import tpu as pltpu


def _residual_block_kernel(x_ref, m_ref, w1_ref, s1_ref, b1_ref, a_ref,
                           w2_ref, s2_ref, b2_ref, out_ref, *, H, W, B_blk):
    """B_blk images per grid step, lane-packed.

    x_ref  : (B_blk, C, H*W)   input images (f32)
    m_ref  : (9, B_blk*H*W)    0/1 validity mask per tap (= zero padding), lane-tiled
    w1/w2  : (C, 9*C) bf16     conv weights packed as [Cout, tap*C + Cin]
    s1/b1  : (C, 1) f32        folded BN1 scale / bias (conv1 bias included)
    a_ref  : (1,) SMEM f32     PReLU slope (single shared parameter)
    s2/b2  : (C, 1) f32        folded BN2 scale / bias (conv2 bias included)
    out_ref: (B_blk, C, H*W)
    """
    C = out_ref.shape[1]
    HW = H * W
    N = B_blk * HW

    # Pack this step's images along the lane axis -> (C, N).  The cyclic-roll +
    # per-tap-mask padding trick stays exact across image boundaries: any lane
    # whose rolled source lies in a neighbouring image is zeroed by the mask.
    if B_blk == 1:
        x = x_ref[0]
    else:
        x = jnp.concatenate([x_ref[i] for i in range(B_blk)], axis=1)

    a = a_ref[0]  # PReLU slope

    def im2col_bf16(v):
        # (C, N) f32 -> (9*C, N) bf16 im2col matrix.  Shifts are cyclic lane
        # rotations (XLU slot, cheap); per-tap (1, N) mask rows are read on the
        # fly and broadcast over sublanes by the multiply; the centre tap's
        # mask is all ones so its multiply is skipped.  Mask math is f32
        # (v5e has no bf16 VPU); only the matmul operands are cast to bf16.
        parts = []
        t = 0
        for dy in (-1, 0, 1):
            for dx in (-1, 0, 1):
                s = dy * W + dx
                p = v if s == 0 else pltpu.roll(v, shift=(-s) % N, axis=1)
                if s != 0:  # centre tap needs no masking
                    p = p * m_ref[pl.ds(t, 1)]
                parts.append(p.astype(jnp.bfloat16))
                t += 1
        return jnp.concatenate(parts, axis=0)

    # ---- conv1 (single K=9*C bf16 MXU matmul, f32 accumulate) + BN1 + PReLU ----
    h1 = jnp.dot(w1_ref[...], im2col_bf16(x), preferred_element_type=jnp.float32)
    h1 = h1 * s1_ref[...] + b1_ref[...]
    h1 = jnp.where(h1 > 0, h1, a * h1)

    # ---- conv2 (single K=9*C bf16 MXU matmul, f32 accumulate) + BN2 ----
    h2 = jnp.dot(w2_ref[...], im2col_bf16(h1), preferred_element_type=jnp.float32)
    h2 = h2 * s2_ref[...] + b2_ref[...]

    # ---- residual add in f32; lane-dense stores (HW is a multiple of 128) ----
    y = x + h2
    for i in range(B_blk):
        out_ref[i] = y[:, i * HW:(i + 1) * HW].astype(out_ref.dtype)


def _pick_b_blk(B, C, HW):
    """Images packed per grid step: amortize per-step overhead while keeping
    >= 2 grid steps when possible (v7x has 2 TensorCores) and capping the bf16
    (9*C, B_blk*HW) im2col block at ~4 MiB."""
    cap = max(1, (4 * 1024 * 1024) // (9 * C * HW * 2))
    b_blk = max(1, min(cap, B // 2)) if B >= 2 else 1
    while B % b_blk:
        b_blk -= 1
    return b_blk


@jax.jit
def residual_block_pallas(x_nchw, params):
    """Runs the ResidualBlock forward pass. x_nchw: (B, C, H, W) float32."""
    B, C, H, W = x_nchw.shape
    HW = H * W
    eps = 1e-5
    B_blk = _pick_b_blk(B, C, HW)

    # NCHW -> (B, C, H*W): pure metadata reshape, no transpose / pad / HBM pass.
    x = x_nchw.reshape(B, C, HW).astype(jnp.float32)

    # PyTorch conv weight (Cout, Cin, 3, 3) -> (Cout, 9*Cin), column = tap*C + Cin.
    # bf16 for the MXU (accumulation stays f32 in-kernel).
    def prep_w(w_oihw):
        return jnp.transpose(w_oihw, (0, 2, 3, 1)).reshape(C, 9 * C).astype(jnp.bfloat16)

    # Fold conv bias + inference-mode BatchNorm into per-channel scale / bias (f32).
    def fold_bn(conv_b, gamma, beta, mean, var):
        scale = gamma / jnp.sqrt(var + eps)
        bias = beta + (conv_b - mean) * scale
        return (scale.reshape(C, 1).astype(jnp.float32),
                bias.reshape(C, 1).astype(jnp.float32))

    w1 = prep_w(params["w1"])
    w2 = prep_w(params["w2"])
    s1, b1 = fold_bn(params["b1"], params["g1"], params["be1"], params["m1"], params["v1"])
    s2, b2 = fold_bn(params["b2"], params["g2"], params["be2"], params["m2"], params["v2"])
    a = params["prelu_a"].reshape(1).astype(jnp.float32)

    # Per-tap 0/1 validity masks (implements padding=1 in-kernel): ONE row per
    # tap (not per channel), tiled along lanes for the B_blk lane-packed images.
    r = jnp.arange(H)
    c = jnp.arange(W)
    taps = []
    for dy in (-1, 0, 1):
        for dx in (-1, 0, 1):
            mr = (r + dy >= 0) & (r + dy < H)
            mc = (c + dx >= 0) & (c + dx < W)
            taps.append((mr[:, None] & mc[None, :]).reshape(HW))
    masks = jnp.tile(jnp.stack(taps).astype(jnp.float32), (1, B_blk))  # (9, B_blk*HW)

    kernel = functools.partial(_residual_block_kernel, H=H, W=W, B_blk=B_blk)

    out = pl.pallas_call(
        kernel,
        out_shape=jax.ShapeDtypeStruct((B, C, HW), jnp.float32),
        grid_spec=pltpu.PrefetchScalarGridSpec(
            num_scalar_prefetch=0,
            grid=(B // B_blk,),  # parallel over image blocks (keeps both v7x TCs busy)
            in_specs=[
                pl.BlockSpec((B_blk, C, HW), lambda b: (b, 0, 0)),
                pl.BlockSpec((9, B_blk * HW), lambda b: (0, 0)),
                pl.BlockSpec((C, 9 * C), lambda b: (0, 0)),
                pl.BlockSpec((C, 1), lambda b: (0, 0)),
                pl.BlockSpec((C, 1), lambda b: (0, 0)),
                pl.BlockSpec(memory_space=pltpu.MemorySpace.SMEM),
                pl.BlockSpec((C, 9 * C), lambda b: (0, 0)),
                pl.BlockSpec((C, 1), lambda b: (0, 0)),
                pl.BlockSpec((C, 1), lambda b: (0, 0)),
            ],
            out_specs=pl.BlockSpec((B_blk, C, HW), lambda b: (b, 0, 0)),
        ),
        compiler_params=pltpu.CompilerParams(
            dimension_semantics=("parallel",),
            vmem_limit_bytes=48 * 1024 * 1024,  # above v5e/v6e scoped defaults, under v7x 64 MiB
        ),
        # TODO(synk): for production sizes (large C*H*W) tile the pixel axis with a
        # 2-row input halo (conv1 recomputed on the halo rows for conv2); if still
        # VMEM-tight on v7x, switch the single big-K matmul to 9 accumulating
        # (C,C)x(C,HW_blk) matmuls to avoid materializing the im2col matrix.
    )(x, masks, w1, s1, b1, a, w2, s2, b2)

    return out.reshape(B, C, H, W)


def residual_block_reference(x_nchw, params):
    """Pure-JAX f32 reference (unfolded BN) for correctness checking."""
    eps = 1e-5
    C = x_nchw.shape[1]
    x = jnp.transpose(x_nchw, (0, 2, 3, 1))  # NHWC

    def conv(x, w_oihw, b):
        w_hwio = jnp.transpose(w_oihw, (2, 3, 1, 0))
        y = jax.lax.conv_general_dilated(
            x, w_hwio, window_strides=(1, 1), padding="SAME",
            dimension_numbers=("NHWC", "HWIO", "NHWC"))
        return y + b.reshape(1, 1, 1, C)

    def bn(y, gamma, beta, mean, var):
        return (y - mean) / jnp.sqrt(var + eps) * gamma + beta

    h = conv(x, params["w1"], params["b1"])
    h = bn(h, params["g1"], params["be1"], params["m1"], params["v1"])
    a = params["prelu_a"]
    h = jnp.where(h > 0, h, a * h)
    h = conv(h, params["w2"], params["b2"])
    h = bn(h, params["g2"], params["be2"], params["m2"], params["v2"])
    out = x + h
    return jnp.transpose(out, (0, 3, 1, 2))


def make_params(key, channels):
    ks = jax.random.split(key, 12)
    C = channels
    std = 1.0 / (C * 9) ** 0.5  # ~ PyTorch conv default init scale
    return {
        "w1": jax.random.normal(ks[0], (C, C, 3, 3), jnp.float32) * std,
        "b1": jax.random.normal(ks[1], (C,), jnp.float32) * std,
        "g1": 1.0 + 0.1 * jax.random.normal(ks[2], (C,), jnp.float32),
        "be1": 0.1 * jax.random.normal(ks[3], (C,), jnp.float32),
        "m1": 0.1 * jax.random.normal(ks[4], (C,), jnp.float32),
        "v1": 1.0 + 0.1 * jax.random.uniform(ks[5], (C,), jnp.float32),
        "prelu_a": jnp.asarray(0.25, jnp.float32),  # nn.PReLU() default (single shared slope)
        "w2": jax.random.normal(ks[6], (C, C, 3, 3), jnp.float32) * std,
        "b2": jax.random.normal(ks[7], (C,), jnp.float32) * std,
        "g2": 1.0 + 0.1 * jax.random.normal(ks[8], (C,), jnp.float32),
        "be2": 0.1 * jax.random.normal(ks[9], (C,), jnp.float32),
        "m2": 0.1 * jax.random.normal(ks[10], (C,), jnp.float32),
        "v2": 1.0 + 0.1 * jax.random.uniform(ks[11], (C,), jnp.float32),
    }


if __name__ == "__main__":
    key = jax.random.PRNGKey(0)
    k_x, k_p = jax.random.split(key)

    # B=4 so the multi-image lane-packing path (B_blk=2) and the parallel grid
    # (2 steps) are both exercised.
    B, C, H, W = 4, 8, 16, 16
    x = jax.random.normal(k_x, (B, C, H, W), jnp.float32)
    params = make_params(k_p, C)

    out = residual_block_pallas(x, params)
    out = jax.block_until_ready(out)

    ref = residual_block_reference(x, params)
    assert out.shape == (B, C, H, W)
    # bf16 MXU operands (f32 accumulation) vs. a pure-f32 reference -> loose tolerance.
    assert jnp.allclose(out, ref, atol=1e-1, rtol=1e-1), float(jnp.max(jnp.abs(out - ref)))

    print("KERNEL_OK")
</pallas_src>

<mosaic_0001>
module attributes {stable_mosaic.version = 11 : i64} {
  func.func @_residual_block_kernel(%arg0: i32, %arg1: memref<2x8x256xf32, #tpu.memory_space<vmem>>, %arg2: memref<9x512xf32, #tpu.memory_space<vmem>>, %arg3: memref<8x72xbf16, #tpu.memory_space<vmem>>, %arg4: memref<8x1xf32, #tpu.memory_space<vmem>>, %arg5: memref<8x1xf32, #tpu.memory_space<vmem>>, %arg6: memref<1xf32, #tpu.memory_space<smem>>, %arg7: memref<8x72xbf16, #tpu.memory_space<vmem>>, %arg8: memref<8x1xf32, #tpu.memory_space<vmem>>, %arg9: memref<8x1xf32, #tpu.memory_space<vmem>>, %arg10: memref<2x8x256xf32, #tpu.memory_space<vmem>>) attributes {dimension_semantics = [#tpu.dimension_semantics<parallel>], iteration_bounds = array<i64: 2>, scalar_prefetch = 0 : i64, scratch_operands = 0 : i64, tpu.core_type = #tpu.core_type<tc>, window_params = [{transform_indices = @transform_0, window_bounds = array<i64: 2, 8, 256>}, {pipeline_mode = #tpu.pipeline_mode<synchronous>, transform_indices = @transform_1, window_bounds = array<i64: 9, 512>}, {pipeline_mode = #tpu.pipeline_mode<synchronous>, transform_indices = @transform_2, window_bounds = array<i64: 8, 72>}, {pipeline_mode = #tpu.pipeline_mode<synchronous>, transform_indices = @transform_3, window_bounds = array<i64: 8, 1>}, {pipeline_mode = #tpu.pipeline_mode<synchronous>, transform_indices = @transform_4, window_bounds = array<i64: 8, 1>}, {transform_indices = @transform_5, window_bounds = array<i64: 1>}, {pipeline_mode = #tpu.pipeline_mode<synchronous>, transform_indices = @transform_6, window_bounds = array<i64: 8, 72>}, {pipeline_mode = #tpu.pipeline_mode<synchronous>, transform_indices = @transform_7, window_bounds = array<i64: 8, 1>}, {pipeline_mode = #tpu.pipeline_mode<synchronous>, transform_indices = @transform_8, window_bounds = array<i64: 8, 1>}, {transform_indices = @transform_9, window_bounds = array<i64: 2, 8, 256>}]} {
    %c0 = arith.constant 0 : index
    %c0_0 = arith.constant 0 : index
    %c0_1 = arith.constant 0 : index
    %0 = vector.load %arg1[%c0, %c0_0, %c0_1] : memref<2x8x256xf32, #tpu.memory_space<vmem>>, vector<1x8x256xf32>
    %1 = vector.shape_cast %0 : vector<1x8x256xf32> to vector<8x256xf32>
    %c1 = arith.constant 1 : index
    %c0_2 = arith.constant 0 : index
    %c0_3 = arith.constant 0 : index
    %2 = vector.load %arg1[%c1, %c0_2, %c0_3] : memref<2x8x256xf32, #tpu.memory_space<vmem>>, vector<1x8x256xf32>
    %3 = vector.shape_cast %2 : vector<1x8x256xf32> to vector<8x256xf32>
    %4 = tpu.concatenate %1, %3 in 1 : vector<8x256xf32>, vector<8x256xf32> -> vector<8x512xf32>
    %c0_4 = arith.constant 0 : index
    %5 = memref.load %arg6[%c0_4] : memref<1xf32, #tpu.memory_space<smem>>
    %c0_5 = arith.constant 0 : index
    %c0_6 = arith.constant 0 : index
    %6 = vector.load %arg3[%c0_5, %c0_6] : memref<8x72xbf16, #tpu.memory_space<vmem>>, vector<8x72xbf16>
    %c17_i32 = arith.constant 17 : i32
    %7 = tpu.dynamic_rotate %4 by %c17_i32 dim 1 : vector<8x512xf32>, i32 -> vector<8x512xf32>
    %c0_7 = arith.constant 0 : index
    %c0_8 = arith.constant 0 : index
    %8 = vector.load %arg2[%c0_7, %c0_8] : memref<9x512xf32, #tpu.memory_space<vmem>>, vector<1x512xf32>
    %9 = vector.broadcast %8 : vector<1x512xf32> to vector<8x512xf32>
    %10 = arith.mulf %7, %9 : vector<8x512xf32>
    %11 = arith.truncf %10 : vector<8x512xf32> to vector<8x512xbf16>
    %c16_i32 = arith.constant 16 : i32
    %12 = tpu.dynamic_rotate %4 by %c16_i32 dim 1 : vector<8x512xf32>, i32 -> vector<8x512xf32>
    %c1_9 = arith.constant 1 : index
    %c0_10 = arith.constant 0 : index
    %13 = vector.load %arg2[%c1_9, %c0_10] : memref<9x512xf32, #tpu.memory_space<vmem>>, vector<1x512xf32>
    %14 = vector.broadcast %13 : vector<1x512xf32> to vector<8x512xf32>
    %15 = arith.mulf %12, %14 : vector<8x512xf32>
    %16 = arith.truncf %15 : vector<8x512xf32> to vector<8x512xbf16>
    %c15_i32 = arith.constant 15 : i32
    %17 = tpu.dynamic_rotate %4 by %c15_i32 dim 1 : vector<8x512xf32>, i32 -> vector<8x512xf32>
    %c2 = arith.constant 2 : index
    %c0_11 = arith.constant 0 : index
    %18 = vector.load %arg2[%c2, %c0_11] : memref<9x512xf32, #tpu.memory_space<vmem>>, vector<1x512xf32>
    %19 = vector.broadcast %18 : vector<1x512xf32> to vector<8x512xf32>
    %20 = arith.mulf %17, %19 : vector<8x512xf32>
    %21 = arith.truncf %20 : vector<8x512xf32> to vector<8x512xbf16>
    %c1_i32 = arith.constant 1 : i32
    %22 = tpu.dynamic_rotate %4 by %c1_i32 dim 1 : vector<8x512xf32>, i32 -> vector<8x512xf32>
    %c3 = arith.constant 3 : index
    %c0_12 = arith.constant 0 : index
    %23 = vector.load %arg2[%c3, %c0_12] : memref<9x512xf32, #tpu.memory_space<vmem>>, vector<1x512xf32>
    %24 = vector.broadcast %23 : vector<1x512xf32> to vector<8x512xf32>
    %25 = arith.mulf %22, %24 : vector<8x512xf32>
    %26 = arith.truncf %25 : vector<8x512xf32> to vector<8x512xbf16>
    %27 = arith.truncf %4 : vector<8x512xf32> to vector<8x512xbf16>
    %c511_i32 = arith.constant 511 : i32
    %28 = tpu.dynamic_rotate %4 by %c511_i32 dim 1 : vector<8x512xf32>, i32 -> vector<8x512xf32>
    %c5 = arith.constant 5 : index
    %c0_13 = arith.constant 0 : index
    %29 = vector.load %arg2[%c5, %c0_13] : memref<9x512xf32, #tpu.memory_space<vmem>>, vector<1x512xf32>
    %30 = vector.broadcast %29 : vector<1x512xf32> to vector<8x512xf32>
    %31 = arith.mulf %28, %30 : vector<8x512xf32>
    %32 = arith.truncf %31 : vector<8x512xf32> to vector<8x512xbf16>
    %c497_i32 = arith.constant 497 : i32
    %33 = tpu.dynamic_rotate %4 by %c497_i32 dim 1 : vector<8x512xf32>, i32 -> vector<8x512xf32>
    %c6 = arith.constant 6 : index
    %c0_14 = arith.constant 0 : index
    %34 = vector.load %arg2[%c6, %c0_14] : memref<9x512xf32, #tpu.memory_space<vmem>>, vector<1x512xf32>
    %35 = vector.broadcast %34 : vector<1x512xf32> to vector<8x512xf32>
    %36 = arith.mulf %33, %35 : vector<8x512xf32>
    %37 = arith.truncf %36 : vector<8x512xf32> to vector<8x512xbf16>
    %c496_i32 = arith.constant 496 : i32
    %38 = tpu.dynamic_rotate %4 by %c496_i32 dim 1 : vector<8x512xf32>, i32 -> vector<8x512xf32>
    %c7 = arith.constant 7 : index
    %c0_15 = arith.constant 0 : index
    %39 = vector.load %arg2[%c7, %c0_15] : memref<9x512xf32, #tpu.memory_space<vmem>>, vector<1x512xf32>
    %40 = vector.broadcast %39 : vector<1x512xf32> to vector<8x512xf32>
    %41 = arith.mulf %38, %40 : vector<8x512xf32>
    %42 = arith.truncf %41 : vector<8x512xf32> to vector<8x512xbf16>
    %c495_i32 = arith.constant 495 : i32
    %43 = tpu.dynamic_rotate %4 by %c495_i32 dim 1 : vector<8x512xf32>, i32 -> vector<8x512xf32>
    %c8 = arith.constant 8 : index
    %c0_16 = arith.constant 0 : index
    %44 = vector.load %arg2[%c8, %c0_16] : memref<9x512xf32, #tpu.memory_space<vmem>>, vector<1x512xf32>
    %45 = vector.broadcast %44 : vector<1x512xf32> to vector<8x512xf32>
    %46 = arith.mulf %43, %45 : vector<8x512xf32>
    %47 = arith.truncf %46 : vector<8x512xf32> to vector<8x512xbf16>
    %48 = tpu.concatenate %11, %16, %21, %26, %27, %32, %37, %42, %47 in 0 : vector<8x512xbf16>, vector<8x512xbf16>, vector<8x512xbf16>, vector<8x512xbf16>, vector<8x512xbf16>, vector<8x512xbf16>, vector<8x512xbf16>, vector<8x512xbf16>, vector<8x512xbf16> -> vector<72x512xbf16>
    %cst = arith.constant dense<0.000000e+00> : vector<8x512xf32>
    %49 = tpu.matmul %6, %48, %cst {dimension_numbers = #tpu.dot_dimension_numbers<[1], [0], [0], [1], [0, 0, 1, 1], [], []>} : vector<8x72xbf16>, vector<72x512xbf16>, vector<8x512xf32> -> vector<8x512xf32>
    %c0_17 = arith.constant 0 : index
    %c0_18 = arith.constant 0 : index
    %50 = vector.load %arg4[%c0_17, %c0_18] : memref<8x1xf32, #tpu.memory_space<vmem>>, vector<8x1xf32>
    %51 = vector.broadcast %50 : vector<8x1xf32> to vector<8x512xf32>
    %52 = arith.mulf %49, %51 : vector<8x512xf32>
    %c0_19 = arith.constant 0 : index
    %c0_20 = arith.constant 0 : index
    %53 = vector.load %arg5[%c0_19, %c0_20] : memref<8x1xf32, #tpu.memory_space<vmem>>, vector<8x1xf32>
    %54 = vector.broadcast %53 : vector<8x1xf32> to vector<8x512xf32>
    %55 = arith.addf %52, %54 : vector<8x512xf32>
    %cst_21 = arith.constant 0.000000e+00 : f32
    %56 = vector.broadcast %cst_21 : f32 to vector<8x512xf32>
    %57 = arith.cmpf ogt, %55, %56 : vector<8x512xf32>
    %58 = vector.broadcast %5 : f32 to vector<8x512xf32>
    %59 = arith.mulf %58, %55 : vector<8x512xf32>
    %60 = arith.select %57, %55, %59 : vector<8x512xi1>, vector<8x512xf32>
    %c0_22 = arith.constant 0 : index
    %c0_23 = arith.constant 0 : index
    %61 = vector.load %arg7[%c0_22, %c0_23] : memref<8x72xbf16, #tpu.memory_space<vmem>>, vector<8x72xbf16>
    %c17_i32_24 = arith.constant 17 : i32
    %62 = tpu.dynamic_rotate %60 by %c17_i32_24 dim 1 : vector<8x512xf32>, i32 -> vector<8x512xf32>
    %c0_25 = arith.constant 0 : index
    %c0_26 = arith.constant 0 : index
    %63 = vector.load %arg2[%c0_25, %c0_26] : memref<9x512xf32, #tpu.memory_space<vmem>>, vector<1x512xf32>
    %64 = vector.broadcast %63 : vector<1x512xf32> to vector<8x512xf32>
    %65 = arith.mulf %62, %64 : vector<8x512xf32>
    %66 = arith.truncf %65 : vector<8x512xf32> to vector<8x512xbf16>
    %c16_i32_27 = arith.constant 16 : i32
    %67 = tpu.dynamic_rotate %60 by %c16_i32_27 dim 1 : vector<8x512xf32>, i32 -> vector<8x512xf32>
    %c1_28 = arith.constant 1 : index
    %c0_29 = arith.constant 0 : index
    %68 = vector.load %arg2[%c1_28, %c0_29] : memref<9x512xf32, #tpu.memory_space<vmem>>, vector<1x512xf32>
    %69 = vector.broadcast %68 : vector<1x512xf32> to vector<8x512xf32>
    %70 = arith.mulf %67, %69 : vector<8x512xf32>
    %71 = arith.truncf %70 : vector<8x512xf32> to vector<8x512xbf16>
    %c15_i32_30 = arith.constant 15 : i32
    %72 = tpu.dynamic_rotate %60 by %c15_i32_30 dim 1 : vector<8x512xf32>, i32 -> vector<8x512xf32>
    %c2_31 = arith.constant 2 : index
    %c0_32 = arith.constant 0 : index
    %73 = vector.load %arg2[%c2_31, %c0_32] : memref<9x512xf32, #tpu.memory_space<vmem>>, vector<1x512xf32>
    %74 = vector.broadcast %73 : vector<1x512xf32> to vector<8x512xf32>
    %75 = arith.mulf %72, %74 : vector<8x512xf32>
    %76 = arith.truncf %75 : vector<8x512xf32> to vector<8x512xbf16>
    %c1_i32_33 = arith.constant 1 : i32
    %77 = tpu.dynamic_rotate %60 by %c1_i32_33 dim 1 : vector<8x512xf32>, i32 -> vector<8x512xf32>
    %c3_34 = arith.constant 3 : index
    %c0_35 = arith.constant 0 : index
    %78 = vector.load %arg2[%c3_34, %c0_35] : memref<9x512xf32, #tpu.memory_space<vmem>>, vector<1x512xf32>
    %79 = vector.broadcast %78 : vector<1x512xf32> to vector<8x512xf32>
    %80 = arith.mulf %77, %79 : vector<8x512xf32>
    %81 = arith.truncf %80 : vector<8x512xf32> to vector<8x512xbf16>
    %82 = arith.truncf %60 : vector<8x512xf32> to vector<8x512xbf16>
    %c511_i32_36 = arith.constant 511 : i32
    %83 = tpu.dynamic_rotate %60 by %c511_i32_36 dim 1 : vector<8x512xf32>, i32 -> vector<8x512xf32>
    %c5_37 = arith.constant 5 : index
    %c0_38 = arith.constant 0 : index
    %84 = vector.load %arg2[%c5_37, %c0_38] : memref<9x512xf32, #tpu.memory_space<vmem>>, vector<1x512xf32>
    %85 = vector.broadcast %84 : vector<1x512xf32> to vector<8x512xf32>
    %86 = arith.mulf %83, %85 : vector<8x512xf32>
    %87 = arith.truncf %86 : vector<8x512xf32> to vector<8x512xbf16>
    %c497_i32_39 = arith.constant 497 : i32
    %88 = tpu.dynamic_rotate %60 by %c497_i32_39 dim 1 : vector<8x512xf32>, i32 -> vector<8x512xf32>
    %c6_40 = arith.constant 6 : index
    %c0_41 = arith.constant 0 : index
    %89 = vector.load %arg2[%c6_40, %c0_41] : memref<9x512xf32, #tpu.memory_space<vmem>>, vector<1x512xf32>
    %90 = vector.broadcast %89 : vector<1x512xf32> to vector<8x512xf32>
    %91 = arith.mulf %88, %90 : vector<8x512xf32>
    %92 = arith.truncf %91 : vector<8x512xf32> to vector<8x512xbf16>
    %c496_i32_42 = arith.constant 496 : i32
    %93 = tpu.dynamic_rotate %60 by %c496_i32_42 dim 1 : vector<8x512xf32>, i32 -> vector<8x512xf32>
    %c7_43 = arith.constant 7 : index
    %c0_44 = arith.constant 0 : index
    %94 = vector.load %arg2[%c7_43, %c0_44] : memref<9x512xf32, #tpu.memory_space<vmem>>, vector<1x512xf32>
    %95 = vector.broadcast %94 : vector<1x512xf32> to vector<8x512xf32>
    %96 = arith.mulf %93, %95 : vector<8x512xf32>
    %97 = arith.truncf %96 : vector<8x512xf32> to vector<8x512xbf16>
    %c495_i32_45 = arith.constant 495 : i32
    %98 = tpu.dynamic_rotate %60 by %c495_i32_45 dim 1 : vector<8x512xf32>, i32 -> vector<8x512xf32>
    %c8_46 = arith.constant 8 : index
    %c0_47 = arith.constant 0 : index
    %99 = vector.load %arg2[%c8_46, %c0_47] : memref<9x512xf32, #tpu.memory_space<vmem>>, vector<1x512xf32>
    %100 = vector.broadcast %99 : vector<1x512xf32> to vector<8x512xf32>
    %101 = arith.mulf %98, %100 : vector<8x512xf32>
    %102 = arith.truncf %101 : vector<8x512xf32> to vector<8x512xbf16>
    %103 = tpu.concatenate %66, %71, %76, %81, %82, %87, %92, %97, %102 in 0 : vector<8x512xbf16>, vector<8x512xbf16>, vector<8x512xbf16>, vector<8x512xbf16>, vector<8x512xbf16>, vector<8x512xbf16>, vector<8x512xbf16>, vector<8x512xbf16>, vector<8x512xbf16> -> vector<72x512xbf16>
    %cst_48 = arith.constant dense<0.000000e+00> : vector<8x512xf32>
    %104 = tpu.matmul %61, %103, %cst_48 {dimension_numbers = #tpu.dot_dimension_numbers<[1], [0], [0], [1], [0, 0, 1, 1], [], []>} : vector<8x72xbf16>, vector<72x512xbf16>, vector<8x512xf32> -> vector<8x512xf32>
    %c0_49 = arith.constant 0 : index
    %c0_50 = arith.constant 0 : index
    %105 = vector.load %arg8[%c0_49, %c0_50] : memref<8x1xf32, #tpu.memory_space<vmem>>, vector<8x1xf32>
    %106 = vector.broadcast %105 : vector<8x1xf32> to vector<8x512xf32>
    %107 = arith.mulf %104, %106 : vector<8x512xf32>
    %c0_51 = arith.constant 0 : index
    %c0_52 = arith.constant 0 : index
    %108 = vector.load %arg9[%c0_51, %c0_52] : memref<8x1xf32, #tpu.memory_space<vmem>>, vector<8x1xf32>
    %109 = vector.broadcast %108 : vector<8x1xf32> to vector<8x512xf32>
    %110 = arith.addf %107, %109 : vector<8x512xf32>
    %111 = arith.addf %4, %110 : vector<8x512xf32>
    %112 = vector.extract_strided_slice %111 {offsets = [0, 0], sizes = [8, 256], strides = [1, 1]} : vector<8x512xf32> to vector<8x256xf32>
    %c0_53 = arith.constant 0 : index
    %c0_54 = arith.constant 0 : index
    %c0_55 = arith.constant 0 : index
    %113 = vector.load %arg10[%c0_53, %c0_54, %c0_55] : memref<2x8x256xf32, #tpu.memory_space<vmem>>, vector<1x8x256xf32>
    %114 = vector.shape_cast %113 : vector<1x8x256xf32> to vector<8x256xf32>
    %115 = vector.shape_cast %112 : vector<8x256xf32> to vector<1x8x256xf32>
    tpu.vector_store %arg10[%c0_53, %c0_54, %c0_55], %115 {strides = array<i32>} : memref<2x8x256xf32, #tpu.memory_space<vmem>>, vector<1x8x256xf32>,
    %116 = vector.extract_strided_slice %111 {offsets = [0, 256], sizes = [8, 256], strides = [1, 1]} : vector<8x512xf32> to vector<8x256xf32>
    %c1_56 = arith.constant 1 : index
    %c0_57 = arith.constant 0 : index
    %c0_58 = arith.constant 0 : index
    %117 = vector.load %arg10[%c1_56, %c0_57, %c0_58] : memref<2x8x256xf32, #tpu.memory_space<vmem>>, vector<1x8x256xf32>
    %118 = vector.shape_cast %117 : vector<1x8x256xf32> to vector<8x256xf32>
    %119 = vector.shape_cast %116 : vector<8x256xf32> to vector<1x8x256xf32>
    tpu.vector_store %arg10[%c1_56, %c0_57, %c0_58], %119 {strides = array<i32>} : memref<2x8x256xf32, #tpu.memory_space<vmem>>, vector<1x8x256xf32>,
    return
  }
  func.func @transform_0(%arg0: i32) -> (i32, i32, i32) {
    %c0_i32 = arith.constant 0 : i32
    %c0_i32_0 = arith.constant 0 : i32
    %c0_i32_1 = arith.constant 0 : i32
    return %arg0, %c0_i32, %c0_i32_0 : i32, i32, i32
  }
  func.func @transform_1(%arg0: i32) -> (i32, i32) {
    %c0_i32 = arith.constant 0 : i32
    %c0_i32_0 = arith.constant 0 : i32
    %c0_i32_1 = arith.constant 0 : i32
    return %c0_i32, %c0_i32_0 : i32, i32
  }
  func.func @transform_2(%arg0: i32) -> (i32, i32) {
    %c0_i32 = arith.constant 0 : i32
    %c0_i32_0 = arith.constant 0 : i32
    %c0_i32_1 = arith.constant 0 : i32
    return %c0_i32, %c0_i32_0 : i32, i32
  }
  func.func @transform_3(%arg0: i32) -> (i32, i32) {
    %c0_i32 = arith.constant 0 : i32
    %c0_i32_0 = arith.constant 0 : i32
    %c0_i32_1 = arith.constant 0 : i32
    return %c0_i32, %c0_i32_0 : i32, i32
  }
  func.func @transform_4(%arg0: i32) -> (i32, i32) {
    %c0_i32 = arith.constant 0 : i32
    %c0_i32_0 = arith.constant 0 : i32
    %c0_i32_1 = arith.constant 0 : i32
    return %c0_i32, %c0_i32_0 : i32, i32
  }
  func.func @transform_5(%arg0: i32) -> i32 {
    %c0_i32 = arith.constant 0 : i32
    %c0_i32_0 = arith.constant 0 : i32
    return %c0_i32 : i32
  }
  func.func @transform_6(%arg0: i32) -> (i32, i32) {
    %c0_i32 = arith.constant 0 : i32
    %c0_i32_0 = arith.constant 0 : i32
    %c0_i32_1 = arith.constant 0 : i32
    return %c0_i32, %c0_i32_0 : i32, i32
  }
  func.func @transform_7(%arg0: i32) -> (i32, i32) {
    %c0_i32 = arith.constant 0 : i32
    %c0_i32_0 = arith.constant 0 : i32
    %c0_i32_1 = arith.constant 0 : i32
    return %c0_i32, %c0_i32_0 : i32, i32
  }
  func.func @transform_8(%arg0: i32) -> (i32, i32) {
    %c0_i32 = arith.constant 0 : i32
    %c0_i32_0 = arith.constant 0 : i32
    %c0_i32_1 = arith.constant 0 : i32
    return %c0_i32, %c0_i32_0 : i32, i32
  }
  func.func @transform_9(%arg0: i32) -> (i32, i32, i32) {
    %c0_i32 = arith.constant 0 : i32
    %c0_i32_0 = arith.constant 0 : i32
    %c0_i32_1 = arith.constant 0 : i32
    return %arg0, %c0_i32, %c0_i32_0 : i32, i32, i32
  }
}

</mosaic_0001>

<llo_original>
// kernel: residual_block_pallas.1
$region0: #{residual_block_pallas.1}
  #allocation0 [shape = 'u32[]', space=smem, size = 0x4, offset = 0x4, fixed_abs, tag = 'smem constant byte address 0x4 - core index']
  #allocation1 [shape = 'u32[144,128]{1,0:T(1,128)}', space=vmem, size = 0x12000, scoped, tag = 'internal scratch']
  #allocation2 [shape = 'f32[1]{0:T(128)S(6)}', space=smem, size = 0x200, scoped, tag = 'scoped memory for residual_block_pallas.1']
  %s0 = inlined_call_operand.vmem [shape: f32[4,8,256], index: 0, kind: input, shape index: {}]
  %s1 = inlined_call_operand.vmem [shape: f32[9,512], index: 1, kind: input, shape index: {}]
  %s2 = inlined_call_operand.vmem [shape: bf16[8,72], index: 2, kind: input, shape index: {}]
  %s3 = inlined_call_operand.vmem [shape: f32[8,1], index: 3, kind: input, shape index: {}]
  %s4 = inlined_call_operand.vmem [shape: f32[8,1], index: 4, kind: input, shape index: {}]
  %s5 = inlined_call_operand.<no memory space> [shape: f32[1], index: 5, kind: input, shape index: {}]
  %s6 = inlined_call_operand.vmem [shape: bf16[8,72], index: 6, kind: input, shape index: {}]
  %s7 = inlined_call_operand.vmem [shape: f32[8,1], index: 7, kind: input, shape index: {}]
  %s8 = inlined_call_operand.vmem [shape: f32[8,1], index: 8, kind: input, shape index: {}]
  %s9 = inlined_call_operand.vmem [shape: f32[4,8,256], index: 9, kind: output, shape index: {}]
  %s10 = sld [smem:[#allocation0]]
  $region69: #{residual_block_pallas.1} parent=0
    _
  %s12 = ssub.s32 1, %s10
  %s13 = scalar_select 0, %s12, %s10
  %14 = sst [smem:[#allocation2]] %s5
  loop: start=0, step=1, limit=4
  $region2: #{residual_block_pallas.1} parent=0 // loop_pre_header
    _
  $region3: #{residual_block_pallas.1} parent=0 // loop_header
    %s16 = sphi 0, %s20
    %p17 = scmp.ge.s32.totalorder %s16, 4
    %s26 = sphi 0, %s28
    %s29 = sphi 0, %s26
    %s30 = sphi 0, %s29
    %s46 = sphi 0, %s30
    %s50 = sphi 0, %s50
    %s52 = sphi 0, %s50
    %s53 = sphi 0, %s52
    %s67 = sphi 0, %s53
    %s71 = sphi 0, %s71
    %s73 = sphi 0, %s71
    %s74 = sphi 0, %s73
    %s88 = sphi 0, %s74
    %s92 = sphi 0, %s92
    %s94 = sphi 0, %s92
    %s95 = sphi 0, %s94
    %s109 = sphi 0, %s95
    %s113 = sphi 0, %s113
    %s115 = sphi 0, %s113
    %s116 = sphi 0, %s115
    %s130 = sphi 0, %s116
    %s134 = sphi 0, %s134
    %s136 = sphi 0, %s134
    %s137 = sphi 0, %s136
    %s151 = sphi 0, %s137
    %s155 = sphi 0, %s155
    %s157 = sphi 0, %s155
    %s158 = sphi 0, %s157
    %s172 = sphi 0, %s158
    %s176 = sphi 0, %s176
    %s178 = sphi 0, %s176
    %s179 = sphi 0, %s178
    %s193 = sphi 0, %s179
    %s197 = sphi 0, %s197
    %s199 = sphi 0, %s197
    %s200 = sphi 0, %s199
    %s214 = sphi 0, %s200
    %s220 = sphi 0, %s222
    %s223 = sphi 0, %s220
    %s224 = sphi 0, %s223
    %s240 = sphi 0, %s224
  $region4: #{residual_block_pallas.1} parent=0 // loop_header_branch
    %19 = sbr.rel (%p17) target = $region8
  $region5: #{residual_block_pallas.1} parent=0 // loop_body
    %s21 = ssub.s32 %s16, 1
    %s22 = ssub.s32 %s16, 2
    %s23 = sadd.s32 %s16, 1
    %s24 = ssub.s32 %s16, %s23
    %p25 = scmp.eq.s32.totalorder %s24, 0
    %s27 = sadd.s32 %s26, 1
    %s28 = scalar_select %p25, %s26, %s27
    %p31 = pneg %p25
    %p32 = scmp.eq.s32.totalorder %s16, 1
    %p33 = por %p31, %p32
    %p34 = scmp.ne.s32.totalorder %s26, %s29
    %p35 = scmp.eq.s32.totalorder %s16, 0
    %p36 = por %p34, %p35
    %p37 = scmp.ne.s32.totalorder %s26, %s29
    %p38 = scmp.eq.s32.totalorder %s21, 1
    %p39 = por %p37, %p38
    %p40 = scmp.ne.s32.totalorder %s29, %s30
    %p41 = scmp.eq.s32.totalorder %s21, 0
    %p42 = por %p40, %p41
    %p43 = scmp.ne.s32.totalorder %s29, %s30
    %p44 = scmp.eq.s32.totalorder %s22, 1
    %p45 = por %p43, %p44
    %p47 = scmp.ne.s32.totalorder %s30, %s46
    %p48 = scmp.eq.s32.totalorder %s22, 0
    %p49 = por %p47, %p48
    %s51 = sadd.s32 %s50, 1
    %p54 = scmp.eq.s32.totalorder %s16, 1
    %p55 = scmp.ne.s32.totalorder %s50, %s52
    %p56 = scmp.eq.s32.totalorder %s16, 0
    %p57 = por %p55, %p56
    %p58 = scmp.ne.s32.totalorder %s50, %s52
    %p59 = scmp.eq.s32.totalorder %s21, 1
    %p60 = por %p58, %p59
    %p61 = scmp.ne.s32.totalorder %s52, %s53
    %p62 = scmp.eq.s32.totalorder %s21, 0
    %p63 = por %p61, %p62
    %p64 = scmp.ne.s32.totalorder %s52, %s53
    %p65 = scmp.eq.s32.totalorder %s22, 1
    %p66 = por %p64, %p65
    %p68 = scmp.ne.s32.totalorder %s53, %s67
    %p69 = scmp.eq.s32.totalorder %s22, 0
    %p70 = por %p68, %p69
    %s72 = sadd.s32 %s71, 1
    %p75 = scmp.eq.s32.totalorder %s16, 1
    %p76 = scmp.ne.s32.totalorder %s71, %s73
    %p77 = scmp.eq.s32.totalorder %s16, 0
    %p78 = por %p76, %p77
    %p79 = scmp.ne.s32.totalorder %s71, %s73
    %p80 = scmp.eq.s32.totalorder %s21, 1
    %p81 = por %p79, %p80
    %p82 = scmp.ne.s32.totalorder %s73, %s74
    %p83 = scmp.eq.s32.totalorder %s21, 0
    %p84 = por %p82, %p83
    %p85 = scmp.ne.s32.totalorder %s73, %s74
    %p86 = scmp.eq.s32.totalorder %s22, 1
    %p87 = por %p85, %p86
    %p89 = scmp.ne.s32.totalorder %s74, %s88
    %p90 = scmp.eq.s32.totalorder %s22, 0
    %p91 = por %p89, %p90
    %s93 = sadd.s32 %s92, 1
    %p96 = scmp.eq.s32.totalorder %s16, 1
    %p97 = scmp.ne.s32.totalorder %s92, %s94
    %p98 = scmp.eq.s32.totalorder %s16, 0
    %p99 = por %p97, %p98
    %p100 = scmp.ne.s32.totalorder %s92, %s94
    %p101 = scmp.eq.s32.totalorder %s21, 1
    %p102 = por %p100, %p101
    %p103 = scmp.ne.s32.totalorder %s94, %s95
    %p104 = scmp.eq.s32.totalorder %s21, 0
    %p105 = por %p103, %p104
    %p106 = scmp.ne.s32.totalorder %s94, %s95
    %p107 = scmp.eq.s32.totalorder %s22, 1
    %p108 = por %p106, %p107
    %p110 = scmp.ne.s32.totalorder %s95, %s109
    %p111 = scmp.eq.s32.totalorder %s22, 0
    %p112 = por %p110, %p111
    %s114 = sadd.s32 %s113, 1
    %p117 = scmp.eq.s32.totalorder %s16, 1
    %p118 = scmp.ne.s32.totalorder %s113, %s115
    %p119 = scmp.eq.s32.totalorder %s16, 0
    %p120 = por %p118, %p119
    %p121 = scmp.ne.s32.totalorder %s113, %s115
    %p122 = scmp.eq.s32.totalorder %s21, 1
    %p123 = por %p121, %p122
    %p124 = scmp.ne.s32.totalorder %s115, %s116
    %p125 = scmp.eq.s32.totalorder %s21, 0
    %p126 = por %p124, %p125
    %p127 = scmp.ne.s32.totalorder %s115, %s116
    %p128 = scmp.eq.s32.totalorder %s22, 1
    %p129 = por %p127, %p128
    %p131 = scmp.ne.s32.totalorder %s116, %s130
    %p132 = scmp.eq.s32.totalorder %s22, 0
    %p133 = por %p131, %p132
    %s135 = sadd.s32 %s134, 1
    %p138 = scmp.eq.s32.totalorder %s16, 1
    %p139 = scmp.ne.s32.totalorder %s134, %s136
    %p140 = scmp.eq.s32.totalorder %s16, 0
    %p141 = por %p139, %p140
    %p142 = scmp.ne.s32.totalorder %s134, %s136
    %p143 = scmp.eq.s32.totalorder %s21, 1
    %p144 = por %p142, %p143
    %p145 = scmp.ne.s32.totalorder %s136, %s137
    %p146 = scmp.eq.s32.totalorder %s21, 0
    %p147 = por %p145, %p146
    %p148 = scmp.ne.s32.totalorder %s136, %s137
    %p149 = scmp.eq.s32.totalorder %s22, 1
    %p150 = por %p148, %p149
    %p152 = scmp.ne.s32.totalorder %s137, %s151
    %p153 = scmp.eq.s32.totalorder %s22, 0
    %p154 = por %p152, %p153
    %s156 = sadd.s32 %s155, 1
    %p159 = scmp.eq.s32.totalorder %s16, 1
    %p160 = scmp.ne.s32.totalorder %s155, %s157
    %p161 = scmp.eq.s32.totalorder %s16, 0
    %p162 = por %p160, %p161
    %p163 = scmp.ne.s32.totalorder %s155, %s157
    %p164 = scmp.eq.s32.totalorder %s21, 1
    %p165 = por %p163, %p164
    %p166 = scmp.ne.s32.totalorder %s157, %s158
    %p167 = scmp.eq.s32.totalorder %s21, 0
    %p168 = por %p166, %p167
    %p169 = scmp.ne.s32.totalorder %s157, %s158
    %p170 = scmp.eq.s32.totalorder %s22, 1
    %p171 = por %p169, %p170
    %p173 = scmp.ne.s32.totalorder %s158, %s172
    %p174 = scmp.eq.s32.totalorder %s22, 0
    %p175 = por %p173, %p174
    %s177 = sadd.s32 %s176, 1
    %p180 = scmp.eq.s32.totalorder %s16, 1
    %p181 = scmp.ne.s32.totalorder %s176, %s178
    %p182 = scmp.eq.s32.totalorder %s16, 0
    %p183 = por %p181, %p182
    %p184 = scmp.ne.s32.totalorder %s176, %s178
    %p185 = scmp.eq.s32.totalorder %s21, 1
    %p186 = por %p184, %p185
    %p187 = scmp.ne.s32.totalorder %s178, %s179
    %p188 = scmp.eq.s32.totalorder %s21, 0
    %p189 = por %p187, %p188
    %p190 = scmp.ne.s32.totalorder %s178, %s179
    %p191 = scmp.eq.s32.totalorder %s22, 1
    %p192 = por %p190, %p191
    %p194 = scmp.ne.s32.totalorder %s179, %s193
    %p195 = scmp.eq.s32.totalorder %s22, 0
    %p196 = por %p194, %p195
    %s198 = sadd.s32 %s197, 1
    %p201 = scmp.eq.s32.totalorder %s16, 1
    %p202 = scmp.ne.s32.totalorder %s197, %s199
    %p203 = scmp.eq.s32.totalorder %s16, 0
    %p204 = por %p202, %p203
    %p205 = scmp.ne.s32.totalorder %s197, %s199
    %p206 = scmp.eq.s32.totalorder %s21, 1
    %p207 = por %p205, %p206
    %p208 = scmp.ne.s32.totalorder %s199, %s200
    %p209 = scmp.eq.s32.totalorder %s21, 0
    %p210 = por %p208, %p209
    %p211 = scmp.ne.s32.totalorder %s199, %s200
    %p212 = scmp.eq.s32.totalorder %s22, 1
    %p213 = por %p211, %p212
    %p215 = scmp.ne.s32.totalorder %s200, %s214
    %p216 = scmp.eq.s32.totalorder %s22, 0
    %p217 = por %p215, %p216
    %s218 = ssub.s32 %s16, %s23
    %p219 = scmp.eq.s32.totalorder %s218, 0
    %s221 = sadd.s32 %s220, 1
    %s222 = scalar_select %p219, %s220, %s221
    %p225 = pneg %p219
    %p226 = scmp.eq.s32.totalorder %s16, 1
    %p227 = por %p225, %p226
    %p228 = scmp.ne.s32.totalorder %s220, %s223
    %p229 = scmp.eq.s32.totalorder %s16, 0
    %p230 = por %p228, %p229
    %p231 = scmp.ne.s32.totalorder %s220, %s223
    %p232 = scmp.eq.s32.totalorder %s21, 1
    %p233 = por %p231, %p232
    %p234 = scmp.ne.s32.totalorder %s223, %s224
    %p235 = scmp.eq.s32.totalorder %s21, 0
    %p236 = por %p234, %p235
    %p237 = scmp.ne.s32.totalorder %s223, %s224
    %p238 = scmp.eq.s32.totalorder %s22, 1
    %p239 = por %p237, %p238
    %p241 = scmp.ne.s32.totalorder %s224, %s240
    %p242 = scmp.eq.s32.totalorder %s22, 0
    %p243 = por %p241, %p242
    %p244 = scmp.le.s32.totalorder 1, %s16
    %p245 = scmp.lt.s32.totalorder %s16, 3
    %p246 = pnand %p244, %p245
    %p247 = pneg %p246
    // Predicated region
    $region9: #{residual_block_pallas.1} parent=5 // pred_check
      _
    $region10: #{residual_block_pallas.1} parent=5 // pred_check_branch
      %249 = sbr.rel (%p246) target = $region12
    $region11: #{residual_block_pallas.1} parent=5 // pred_region
      %s250 = ssub.s32 %s16, 1
      // Predicated region
      $region13: #{residual_block_pallas.1} parent=11 // pred_check
        %p251 = pneg %p63
      $region14: #{residual_block_pallas.1} parent=11 // pred_check_branch
        %253 = sbr.rel (%p251) target = $region16
      $region15: #{residual_block_pallas.1} parent=11 // pred_region
        _
      $region16: #{residual_block_pallas.1} parent=11 // pred_fallthru
        _
      // Predicated region
      $region17: #{residual_block_pallas.1} parent=11 // pred_check
        %p254 = pneg %p84
      $region18: #{residual_block_pallas.1} parent=11 // pred_check_branch
        %256 = sbr.rel (%p254) target = $region20
      $region19: #{residual_block_pallas.1} parent=11 // pred_region
        _
      $region20: #{residual_block_pallas.1} parent=11 // pred_fallthru
        _
      // Predicated region
      $region21: #{residual_block_pallas.1} parent=11 // pred_check
        %p257 = pneg %p105
      $region22: #{residual_block_pallas.1} parent=11 // pred_check_branch
        %259 = sbr.rel (%p257) target = $region24
      $region23: #{residual_block_pallas.1} parent=11 // pred_region
        _
      $region24: #{residual_block_pallas.1} parent=11 // pred_fallthru
        _
      // Predicated region
      $region25: #{residual_block_pallas.1} parent=11 // pred_check
        %p260 = pneg %p126
      $region26: #{residual_block_pallas.1} parent=11 // pred_check_branch
        %262 = sbr.rel (%p260) target = $region28
      $region27: #{residual_block_pallas.1} parent=11 // pred_region
        _
      $region28: #{residual_block_pallas.1} parent=11 // pred_fallthru
        _
      // Predicated region
      $region29: #{residual_block_pallas.1} parent=11 // pred_check
        %p263 = pneg %p147
      $region30: #{residual_block_pallas.1} parent=11 // pred_check_branch
        %265 = sbr.rel (%p263) target = $region32
      $region31: #{residual_block_pallas.1} parent=11 // pred_region
        _
      $region32: #{residual_block_pallas.1} parent=11 // pred_fallthru
        _
      // Predicated region
      $region33: #{residual_block_pallas.1} parent=11 // pred_check
        %p266 = pneg %p168
      $region34: #{residual_block_pallas.1} parent=11 // pred_check_branch
        %268 = sbr.rel (%p266) target = $region36
      $region35: #{residual_block_pallas.1} parent=11 // pred_region
        _
      $region36: #{residual_block_pallas.1} parent=11 // pred_fallthru
        _
      // Predicated region
      $region37: #{residual_block_pallas.1} parent=11 // pred_check
        %p269 = pneg %p189
      $region38: #{residual_block_pallas.1} parent=11 // pred_check_branch
        %271 = sbr.rel (%p269) target = $region40
      $region39: #{residual_block_pallas.1} parent=11 // pred_region
        _
      $region40: #{residual_block_pallas.1} parent=11 // pred_fallthru
        _
      // Predicated region
      $region41: #{residual_block_pallas.1} parent=11 // pred_check
        %p272 = pneg %p210
      $region42: #{residual_block_pallas.1} parent=11 // pred_check_branch
        %274 = sbr.rel (%p272) target = $region44
      $region43: #{residual_block_pallas.1} parent=11 // pred_region
        _
      $region44: #{residual_block_pallas.1} parent=11 // pred_fallthru
        _
    $region12: #{residual_block_pallas.1} parent=5 // pred_fallthru
      _
    %p275 = scmp.lt.s32.totalorder %s16, 2
    // Predicated region
    $region45: #{residual_block_pallas.1} parent=5 // pred_check
      %p276 = pneg %p275
    $region46: #{residual_block_pallas.1} parent=5 // pred_check_branch
      %278 = sbr.rel (%p276) target = $region48
    $region47: #{residual_block_pallas.1} parent=5 // pred_region
      // Predicated region
      $region49: #{residual_block_pallas.1} parent=47 // pred_check
        %p279 = pneg %p36
      $region50: #{residual_block_pallas.1} parent=47 // pred_check_branch
        %281 = sbr.rel (%p279) target = $region52
      $region51: #{residual_block_pallas.1} parent=47 // pred_region
        %s282 = smul.u32 2, %s16
        %p283 = scmp.lt.s32.totalorder %s282, 3
        %s284 = scalar_select %p283, %s282, 3
        %s285 = smul.addr %s284, 2
        %s286 = smul.addr %s285, 8
        %s287 = scalar_lea.vmem %s0, %s286
        %s288 = smul.u32 2, %s16
      $region52: #{residual_block_pallas.1} parent=47 // pred_fallthru
        _
    $region48: #{residual_block_pallas.1} parent=5 // pred_fallthru
      _
    %p289 = scmp.le.s32.totalorder 1, %s16
    %p290 = scmp.lt.s32.totalorder %s16, 3
    %p291 = pnand %p289, %p290
    %p292 = pneg %p291
    // Predicated region
    $region53: #{residual_block_pallas.1} parent=5 // pred_check
      _
    $region54: #{residual_block_pallas.1} parent=5 // pred_check_branch
      %294 = sbr.rel (%p291) target = $region56
    $region55: #{residual_block_pallas.1} parent=5 // pred_region
      %s295 = ssub.s32 %s16, 1
      %s296 = smul.u32 2, %s21
      %p297 = scmp.lt.s32.totalorder %s296, 3
      %s298 = scalar_select %p297, %s296, 3
      %s299 = smul.addr %s298, 2
      %s300 = smul.addr %s299, 8
      %s301 = scalar_lea.vmem %s0, %s300
      %p302 = pneg %p42
      %p303 = pneg %p39
      %p304 = pneg %p63
      %p305 = pneg %p60
      %p306 = pneg %p84
      %p307 = pneg %p81
      %p308 = pneg %p105
      %p309 = pneg %p102
      %p310 = pneg %p126
      %p311 = pneg %p123
      %p312 = pneg %p147
      %p313 = pneg %p144
      %p314 = pneg %p168
      %p315 = pneg %p165
      %p316 = pneg %p189
      %p317 = pneg %p186
      %p318 = pneg %p210
      %p319 = pneg %p207
      %p320 = pneg %p236
      %p321 = pneg %p233
      %s322 = smul.u32 2, %s21
      %p323 = scmp.lt.s32.totalorder %s322, 3
      %s324 = scalar_select %p323, %s322, 3
      %s325 = smul.addr %s324, 2
      %s326 = smul.addr %s325, 8
      %s327 = scalar_lea.vmem %s9, %s326
      %s328 = smul.u32 2, %s21
      %p329 = scmp.lt.s32.totalorder %s328, 3
      %s330 = scalar_select %p329, %s328, 3
      %s331 = smul.addr %s330, 2
      %s332 = smul.addr %s331, 8
      %s333 = scalar_lea.vmem %s0, %s332
      %s334 = smul.u32 2, %s21
      %s335 = smul.u32 2, %s21
      %p336 = scmp.lt.s32.totalorder %s335, 3
      %s337 = scalar_select %p336, %s335, 3
      %s338 = smul.addr %s337, 2
      %s339 = smul.addr %s338, 8
      %s340 = scalar_lea.vmem %s9, %s339
      %s341 = smul.u32 2, %s21
      %v343 = vld [vmem:[%s333] sm:$0xff]
      %v344 = vld [vmem:[%s333 + $0x8] sm:$0xff]
      %s345 = scalar_lea.vmem %s333, 16
      %v346 = vld [vmem:[%s345] sm:$0xff]
      %v347 = vld [vmem:[%s345 + $0x8] sm:$0xff]
      %s348 = sld [smem:[#allocation2]]
      %v349 = vld [vmem:[%s2] sm:$0xf]
      %350 = vrot.lane.b32.xlu0 %v343, 17
      %v351 = vpop.permute.xlu0 %350
      %352 = vrot.lane.b32.xlu0 %v344, 17
      %v353 = vpop.permute.xlu0 %352
      %354 = vrot.lane.b32.xlu0 %v346, 17
      %v355 = vpop.permute.xlu0 %354
      %356 = vrot.lane.b32.xlu0 %v347, 17
      %v357 = vpop.permute.xlu0 %356
      %v358 = vlaneseq
      %v359 = vand.u32 %v358, 127
      %vm360 = vcmp.lt.s32.totalorder %v359, 17
      %v361 = vsel %vm360, %v355, %v357
      %v362 = vsel %vm360, %v353, %v355
      %v363 = vsel %vm360, %v351, %v353
      %v364 = vsel %vm360, %v357, %v351
      %v365 = vld [vmem:[%s1] ss:$8 sm:$0xf]
      %v367 = vlaneseq
      %v368 = vshrl.u32 %v367, 7
      %v369 = vsub.s32 0, %v368
      %v370 = vrot.slane %v365, %v369
      %v371 = vlaneseq
      %v372 = vshrl.u32 %v371, 7
      %v373 = vsub.s32 1, %v372
      %v374 = vrot.slane %v365, %v373
      %v375 = vlaneseq
      %v376 = vshrl.u32 %v375, 7
      %v377 = vsub.s32 2, %v376
      %v378 = vrot.slane %v365, %v377
      %v379 = vlaneseq
      %v380 = vshrl.u32 %v379, 7
      %v381 = vsub.s32 3, %v380
      %v382 = vrot.slane %v365, %v381
      %v387 = vmul.f32 %v364, %v370
      %v388 = vmul.f32 %v363, %v374
      %v389 = vmul.f32 %v362, %v378
      %v390 = vmul.f32 %v361, %v382
      %v391 = vpack.c.bf16 %v387, %v387
      %v392 = vpack.c.bf16 %v388, %v388
      %v393 = vpack.c.bf16 %v389, %v389
      %v394 = vpack.c.bf16 %v390, %v390
      %395 = vrot.lane.b32.xlu0 %v343, 16
      %v396 = vpop.permute.xlu0 %395
      %397 = vrot.lane.b32.xlu0 %v344, 16
      %v398 = vpop.permute.xlu0 %397
      %399 = vrot.lane.b32.xlu0 %v346, 16
      %v400 = vpop.permute.xlu0 %399
      %401 = vrot.lane.b32.xlu0 %v347, 16
      %v402 = vpop.permute.xlu0 %401
      %vm403 = vcmp.lt.s32.totalorder %v359, 16
      %v404 = vsel %vm403, %v400, %v402
      %v405 = vsel %vm403, %v398, %v400
      %v406 = vsel %vm403, %v396, %v398
      %v407 = vsel %vm403, %v402, %v396
      %s408 = scalar_lea.vmem %s1, 1
      %v409 = vld [vmem:[%s408] ss:$8 sm:$0xf]
      %v411 = vlaneseq
      %v412 = vshrl.u32 %v411, 7
      %v413 = vsub.s32 0, %v412
      %v414 = vrot.slane %v409, %v413
      %v415 = vlaneseq
      %v416 = vshrl.u32 %v415, 7
      %v417 = vsub.s32 1, %v416
      %v418 = vrot.slane %v409, %v417
      %v419 = vlaneseq
      %v420 = vshrl.u32 %v419, 7
      %v421 = vsub.s32 2, %v420
      %v422 = vrot.slane %v409, %v421
      %v423 = vlaneseq
      %v424 = vshrl.u32 %v423, 7
      %v425 = vsub.s32 3, %v424
      %v426 = vrot.slane %v409, %v425
      %v431 = vmul.f32 %v407, %v414
      %v432 = vmul.f32 %v406, %v418
      %v433 = vmul.f32 %v405, %v422
      %v434 = vmul.f32 %v404, %v426
      %v435 = vpack.c.bf16 %v431, %v431
      %v436 = vpack.c.bf16 %v432, %v432
      %v437 = vpack.c.bf16 %v433, %v433
      %v438 = vpack.c.bf16 %v434, %v434
      %439 = vrot.lane.b32.xlu0 %v343, 15
      %v440 = vpop.permute.xlu0 %439
      %441 = vrot.lane.b32.xlu0 %v344, 15
      %v442 = vpop.permute.xlu0 %441
      %443 = vrot.lane.b32.xlu0 %v346, 15
      %v444 = vpop.permute.xlu0 %443
      %445 = vrot.lane.b32.xlu0 %v347, 15
      %v446 = vpop.permute.xlu0 %445
      %vm447 = vcmp.lt.s32.totalorder %v359, 15
      %v448 = vsel %vm447, %v444, %v446
      %v449 = vsel %vm447, %v442, %v444
      %v450 = vsel %vm447, %v440, %v442
      %v451 = vsel %vm447, %v446, %v440
      %s452 = scalar_lea.vmem %s1, 2
      %v453 = vld [vmem:[%s452] ss:$8 sm:$0xf]
      %v455 = vlaneseq
      %v456 = vshrl.u32 %v455, 7
      %v457 = vsub.s32 0, %v456
      %v458 = vrot.slane %v453, %v457
      %v459 = vlaneseq
      %v460 = vshrl.u32 %v459, 7
      %v461 = vsub.s32 1, %v460
      %v462 = vrot.slane %v453, %v461
      %v463 = vlaneseq
      %v464 = vshrl.u32 %v463, 7
      %v465 = vsub.s32 2, %v464
      %v466 = vrot.slane %v453, %v465
      %v467 = vlaneseq
      %v468 = vshrl.u32 %v467, 7
      %v469 = vsub.s32 3, %v468
      %v470 = vrot.slane %v453, %v469
      %v475 = vmul.f32 %v451, %v458
      %v476 = vmul.f32 %v450, %v462
      %v477 = vmul.f32 %v449, %v466
      %v478 = vmul.f32 %v448, %v470
      %v479 = vpack.c.bf16 %v475, %v475
      %v480 = vpack.c.bf16 %v476, %v476
      %v481 = vpack.c.bf16 %v477, %v477
      %v482 = vpack.c.bf16 %v478, %v478
      %483 = vrot.lane.b32.xlu0 %v343, 1
      %v484 = vpop.permute.xlu0 %483
      %485 = vrot.lane.b32.xlu0 %v344, 1
      %v486 = vpop.permute.xlu0 %485
      %487 = vrot.lane.b32.xlu0 %v346, 1
      %v488 = vpop.permute.xlu0 %487
      %489 = vrot.lane.b32.xlu0 %v347, 1
      %v490 = vpop.permute.xlu0 %489
      %vm491 = vcmp.lt.s32.totalorder %v359, 1
      %v492 = vsel %vm491, %v488, %v490
      %v493 = vsel %vm491, %v486, %v488
      %v494 = vsel %vm491, %v484, %v486
      %v495 = vsel %vm491, %v490, %v484
      %s496 = scalar_lea.vmem %s1, 3
      %v497 = vld [vmem:[%s496] ss:$8 sm:$0xf]
      %v499 = vlaneseq
      %v500 = vshrl.u32 %v499, 7
      %v501 = vsub.s32 0, %v500
      %v502 = vrot.slane %v497, %v501
      %v503 = vlaneseq
      %v504 = vshrl.u32 %v503, 7
      %v505 = vsub.s32 1, %v504
      %v506 = vrot.slane %v497, %v505
      %v507 = vlaneseq
      %v508 = vshrl.u32 %v507, 7
      %v509 = vsub.s32 2, %v508
      %v510 = vrot.slane %v497, %v509
      %v511 = vlaneseq
      %v512 = vshrl.u32 %v511, 7
      %v513 = vsub.s32 3, %v512
      %v514 = vrot.slane %v497, %v513
      %v519 = vmul.f32 %v495, %v502
      %v520 = vmul.f32 %v494, %v506
      %v521 = vmul.f32 %v493, %v510
      %v522 = vmul.f32 %v492, %v514
      %v523 = vpack.c.bf16 %v519, %v519
      %v524 = vpack.c.bf16 %v520, %v520
      %v525 = vpack.c.bf16 %v521, %v521
      %v526 = vpack.c.bf16 %v522, %v522
      %v527 = vpack.c.bf16 %v343, %v343
      %v528 = vpack.c.bf16 %v344, %v344
      %v529 = vpack.c.bf16 %v346, %v346
      %v530 = vpack.c.bf16 %v347, %v347
      %531 = vrot.lane.b32.xlu0 %v343, 127
      %v532 = vpop.permute.xlu0 %531
      %533 = vrot.lane.b32.xlu0 %v344, 127
      %v534 = vpop.permute.xlu0 %533
      %535 = vrot.lane.b32.xlu0 %v346, 127
      %v536 = vpop.permute.xlu0 %535
      %537 = vrot.lane.b32.xlu0 %v347, 127
      %v538 = vpop.permute.xlu0 %537
      %vm539 = vcmp.lt.s32.totalorder %v359, 127
      %v540 = vsel %vm539, %v536, %v538
      %v541 = vsel %vm539, %v534, %v536
      %v542 = vsel %vm539, %v532, %v534
      %v543 = vsel %vm539, %v538, %v532
      %s544 = scalar_lea.vmem %s1, 5
      %v545 = vld [vmem:[%s544] ss:$8 sm:$0xf]
      %v547 = vlaneseq
      %v548 = vshrl.u32 %v547, 7
      %v549 = vsub.s32 0, %v548
      %v550 = vrot.slane %v545, %v549
      %v551 = vlaneseq
      %v552 = vshrl.u32 %v551, 7
      %v553 = vsub.s32 1, %v552
      %v554 = vrot.slane %v545, %v553
      %v555 = vlaneseq
      %v556 = vshrl.u32 %v555, 7
      %v557 = vsub.s32 2, %v556
      %v558 = vrot.slane %v545, %v557
      %v559 = vlaneseq
      %v560 = vshrl.u32 %v559, 7
      %v561 = vsub.s32 3, %v560
      %v562 = vrot.slane %v545, %v561
      %v567 = vmul.f32 %v542, %v550
      %v568 = vmul.f32 %v541, %v554
      %v569 = vmul.f32 %v540, %v558
      %v570 = vmul.f32 %v543, %v562
      %v571 = vpack.c.bf16 %v567, %v567
      %v572 = vpack.c.bf16 %v568, %v568
      %v573 = vpack.c.bf16 %v569, %v569
      %v574 = vpack.c.bf16 %v570, %v570
      %575 = vrot.lane.b32.xlu0 %v343, 113
      %v576 = vpop.permute.xlu0 %575
      %577 = vrot.lane.b32.xlu0 %v344, 113
      %v578 = vpop.permute.xlu0 %577
      %579 = vrot.lane.b32.xlu0 %v346, 113
      %v580 = vpop.permute.xlu0 %579
      %581 = vrot.lane.b32.xlu0 %v347, 113
      %v582 = vpop.permute.xlu0 %581
      %vm583 = vcmp.lt.s32.totalorder %v359, 113
      %v584 = vsel %vm583, %v580, %v582
      %v585 = vsel %vm583, %v578, %v580
      %v586 = vsel %vm583, %v576, %v578
      %v587 = vsel %vm583, %v582, %v576
      %s588 = scalar_lea.vmem %s1, 6
      %v589 = vld [vmem:[%s588] ss:$8 sm:$0xf]
      %v591 = vlaneseq
      %v592 = vshrl.u32 %v591, 7
      %v593 = vsub.s32 0, %v592
      %v594 = vrot.slane %v589, %v593
      %v595 = vlaneseq
      %v596 = vshrl.u32 %v595, 7
      %v597 = vsub.s32 1, %v596
      %v598 = vrot.slane %v589, %v597
      %v599 = vlaneseq
      %v600 = vshrl.u32 %v599, 7
      %v601 = vsub.s32 2, %v600
      %v602 = vrot.slane %v589, %v601
      %v603 = vlaneseq
      %v604 = vshrl.u32 %v603, 7
      %v605 = vsub.s32 3, %v604
      %v606 = vrot.slane %v589, %v605
      %v611 = vmul.f32 %v586, %v594
      %v612 = vmul.f32 %v585, %v598
      %v613 = vmul.f32 %v584, %v602
      %v614 = vmul.f32 %v587, %v606
      %v615 = vpack.c.bf16 %v611, %v611
      %v616 = vpack.c.bf16 %v612, %v612
      %v617 = vpack.c.bf16 %v613, %v613
      %v618 = vpack.c.bf16 %v614, %v614
      %619 = vrot.lane.b32.xlu0 %v343, 112
      %v620 = vpop.permute.xlu0 %619
      %621 = vrot.lane.b32.xlu0 %v344, 112
      %v622 = vpop.permute.xlu0 %621
      %623 = vrot.lane.b32.xlu0 %v346, 112
      %v624 = vpop.permute.xlu0 %623
      %625 = vrot.lane.b32.xlu0 %v347, 112
      %v626 = vpop.permute.xlu0 %625
      %vm627 = vcmp.lt.s32.totalorder %v359, 112
      %v628 = vsel %vm627, %v624, %v626
      %v629 = vsel %vm627, %v622, %v624
      %v630 = vsel %vm627, %v620, %v622
      %v631 = vsel %vm627, %v626, %v620
      %s632 = scalar_lea.vmem %s1, 7
      %v633 = vld [vmem:[%s632] ss:$8 sm:$0xf]
      %v635 = vlaneseq
      %v636 = vshrl.u32 %v635, 7
      %v637 = vsub.s32 0, %v636
      %v638 = vrot.slane %v633, %v637
      %v639 = vlaneseq
      %v640 = vshrl.u32 %v639, 7
      %v641 = vsub.s32 1, %v640
      %v642 = vrot.slane %v633, %v641
      %v643 = vlaneseq
      %v644 = vshrl.u32 %v643, 7
      %v645 = vsub.s32 2, %v644
      %v646 = vrot.slane %v633, %v645
      %v647 = vlaneseq
      %v648 = vshrl.u32 %v647, 7
      %v649 = vsub.s32 3, %v648
      %v650 = vrot.slane %v633, %v649
      %v655 = vmul.f32 %v630, %v638
      %v656 = vmul.f32 %v629, %v642
      %v657 = vmul.f32 %v628, %v646
      %v658 = vmul.f32 %v631, %v650
      %v659 = vpack.c.bf16 %v655, %v655
      %v660 = vpack.c.bf16 %v656, %v656
      %v661 = vpack.c.bf16 %v657, %v657
      %v662 = vpack.c.bf16 %v658, %v658
      %663 = vrot.lane.b32.xlu0 %v343, 111
      %v664 = vpop.permute.xlu0 %663
      %665 = vrot.lane.b32.xlu0 %v344, 111
      %v666 = vpop.permute.xlu0 %665
      %667 = vrot.lane.b32.xlu0 %v346, 111
      %v668 = vpop.permute.xlu0 %667
      %669 = vrot.lane.b32.xlu0 %v347, 111
      %v670 = vpop.permute.xlu0 %669
      %vm671 = vcmp.lt.s32.totalorder %v359, 111
      %v672 = vsel %vm671, %v668, %v670
      %v673 = vsel %vm671, %v666, %v668
      %v674 = vsel %vm671, %v664, %v666
      %v675 = vsel %vm671, %v670, %v664
      %s676 = scalar_lea.vmem %s1, 32
      %v677 = vld [vmem:[%s676] ss:$8 sm:$0xf]
      %v679 = vlaneseq
      %v680 = vshrl.u32 %v679, 7
      %v681 = vsub.s32 0, %v680
      %v682 = vrot.slane %v677, %v681
      %v683 = vlaneseq
      %v684 = vshrl.u32 %v683, 7
      %v685 = vsub.s32 1, %v684
      %v686 = vrot.slane %v677, %v685
      %v687 = vlaneseq
      %v688 = vshrl.u32 %v687, 7
      %v689 = vsub.s32 2, %v688
      %v690 = vrot.slane %v677, %v689
      %v691 = vlaneseq
      %v692 = vshrl.u32 %v691, 7
      %v693 = vsub.s32 3, %v692
      %v694 = vrot.slane %v677, %v693
      %v699 = vmul.f32 %v674, %v682
      %v700 = vmul.f32 %v673, %v686
      %v701 = vmul.f32 %v672, %v690
      %v702 = vmul.f32 %v675, %v694
      %v703 = vpack.c.bf16 %v699, %v699
      %v704 = vpack.c.bf16 %v700, %v700
      %v705 = vpack.c.bf16 %v701, %v701
      %v706 = vpack.c.bf16 %v702, %v702
      %v711 = vrot.slane %v435, 4
      %v712 = vrot.slane %v436, 4
      %v713 = vrot.slane %v437, 4
      %v714 = vrot.slane %v438, 4
      %v719 = vrot.slane %v523, 4
      %v720 = vrot.slane %v524, 4
      %v721 = vrot.slane %v525, 4
      %v722 = vrot.slane %v526, 4
      %v727 = vrot.slane %v571, 4
      %v728 = vrot.slane %v572, 4
      %v729 = vrot.slane %v573, 4
      %v730 = vrot.slane %v574, 4
      %v735 = vrot.slane %v659, 4
      %v736 = vrot.slane %v660, 4
      %v737 = vrot.slane %v661, 4
      %v738 = vrot.slane %v662, 4
      %vm739 = vcmask 1043456
      %v742 = vsel %vm739, %v391, %v711
      %v746 = vsel %vm739, %v392, %v712
      %v750 = vsel %vm739, %v393, %v713
      %v754 = vsel %vm739, %v394, %v714
      %v758 = vsel %vm739, %v479, %v719
      %v762 = vsel %vm739, %v480, %v720
      %v766 = vsel %vm739, %v481, %v721
      %v770 = vsel %vm739, %v482, %v722
      %v774 = vsel %vm739, %v527, %v727
      %v778 = vsel %vm739, %v528, %v728
      %v782 = vsel %vm739, %v529, %v729
      %v786 = vsel %vm739, %v530, %v730
      %v790 = vsel %vm739, %v615, %v735
      %v794 = vsel %vm739, %v616, %v736
      %v798 = vsel %vm739, %v617, %v737
      %v802 = vsel %vm739, %v618, %v738
      %vm804 = vcmask 588800
      %v806 = vsel %vm804, %v349, 0
      %v809 = vsel %vm739, %v703, 0
      %v812 = vsel %vm739, %v704, 0
      %v815 = vsel %vm739, %v705, 0
      %v818 = vsel %vm739, %v706, 0
      %820 = vmatprep.subr.bf16.mxu0 %v746
      %821 = vmatpush1.bf16.msra.mxu0 %v742
      %822 = vmatprep.subr.bf16.mxu0 %v762
      %823 = vmatpush1.bf16.msra.mxu0 %v758
      %824 = vmatprep.subr.bf16.mxu0 %v778
      %825 = vmatpush1.bf16.msra.mxu0 %v774
      %826 = vmatprep.subr.bf16.mxu0 %v794
      %827 = vmatpush1.bf16.msra.mxu0 %v790
      %828 = vmatprep.subr.bf16.mxu0 %v812
      %829 = vmatpush1.bf16.msra.mxu0 %v809
      %830 = vmatprep.subr.bf16.mxu0 0
      %831 = vmatpush1.bf16.msra.mxu0 0
      %832 = vmatprep.subr.bf16.mxu0 0
      %833 = vmatpush1.bf16.msra.mxu0 0
      %834 = vmatprep.subr.bf16.mxu0 0
      %835 = vmatpush1.bf16.msra.mxu0 0
      %836 = vmatprep.subr.bf16.mxu0 0
      %837 = vmatpush1.bf16.msra.mxu0 0
      %838 = vmatprep.subr.bf16.mxu0 0
      %839 = vmatpush1.bf16.msra.mxu0 0
      %840 = vmatprep.subr.bf16.mxu0 0
      %841 = vmatpush1.bf16.msra.mxu0 0
      %842 = vmatprep.subr.bf16.mxu0 0
      %843 = vmatpush1.bf16.msra.mxu0 0
      %844 = vmatprep.subr.bf16.mxu0 0
      %845 = vmatpush1.bf16.msra.mxu0 0
      %846 = vmatprep.subr.bf16.mxu0 0
      %847 = vmatpush1.bf16.msra.mxu0 0
      %848 = vmatprep.subr.bf16.mxu0 0
      %849 = vmatpush1.bf16.msra.mxu0 0
      %850 = vmatprep.subr.bf16.mxu0 0
      %851 = vmatpush1.bf16.msra.mxu0 0
      %852 = vmatprep.mubr.bf16.mxu0 0
      %853 = vmatmul.mubr.bf16.gmra.mrb[0].mxu0 %v806
      %v854 = vpop.f32.mrb[0].mxu0
      %v855 = vadd.f32 0.0, %v854
      %v856 = vpop.f32.mrb[0].mxu0
      %v857 = vadd.f32 0.0, %v856
      %v858 = vpop.f32.mrb[0].mxu0
      %v859 = vpop.f32.mrb[0].mxu0
      %860 = vdwg.mxu0
      %861 = vmatprep.subr.bf16.mxu0 %v754
      %862 = vmatpush1.bf16.msra.mxu0 %v750
      %863 = vmatprep.subr.bf16.mxu0 %v770
      %864 = vmatpush1.bf16.msra.mxu0 %v766
      %865 = vmatprep.subr.bf16.mxu0 %v786
      %866 = vmatpush1.bf16.msra.mxu0 %v782
      %867 = vmatprep.subr.bf16.mxu0 %v802
      %868 = vmatpush1.bf16.msra.mxu0 %v798
      %869 = vmatprep.subr.bf16.mxu0 %v818
      %870 = vmatpush1.bf16.msra.mxu0 %v815
      %871 = vmatprep.subr.bf16.mxu0 0
      %872 = vmatpush1.bf16.msra.mxu0 0
      %873 = vmatprep.subr.bf16.mxu0 0
      %874 = vmatpush1.bf16.msra.mxu0 0
      %875 = vmatprep.subr.bf16.mxu0 0
      %876 = vmatpush1.bf16.msra.mxu0 0
      %877 = vmatprep.subr.bf16.mxu0 0
      %878 = vmatpush1.bf16.msra.mxu0 0
      %879 = vmatprep.subr.bf16.mxu0 0
      %880 = vmatpush1.bf16.msra.mxu0 0
      %881 = vmatprep.subr.bf16.mxu0 0
      %882 = vmatpush1.bf16.msra.mxu0 0
      %883 = vmatprep.subr.bf16.mxu0 0
      %884 = vmatpush1.bf16.msra.mxu0 0
      %885 = vmatprep.subr.bf16.mxu0 0
      %886 = vmatpush1.bf16.msra.mxu0 0
      %887 = vmatprep.subr.bf16.mxu0 0
      %888 = vmatpush1.bf16.msra.mxu0 0
      %889 = vmatprep.subr.bf16.mxu0 0
      %890 = vmatpush1.bf16.msra.mxu0 0
      %891 = vmatprep.subr.bf16.mxu0 0
      %892 = vmatpush1.bf16.msra.mxu0 0
      %893 = vmatprep.mubr.bf16.mxu0 0
      %894 = vmatmul.mubr.bf16.gmra.mrb[0].mxu0 %v806
      %v895 = vpop.f32.mrb[0].mxu0
      %v896 = vadd.f32 0.0, %v895
      %v897 = vpop.f32.mrb[0].mxu0
      %v898 = vadd.f32 0.0, %v897
      %v899 = vpop.f32.mrb[0].mxu0
      %v900 = vpop.f32.mrb[0].mxu0
      %901 = vdwg.mxu0
      %v902 = vld [vmem:[%s3] sm:$0xff]
      %904 = vset.pattern.permute.xlu0 0
      %905 = vperm.xlu0 %904, %v902
      %v906 = vpop.permute.xlu0 %905
      %v908 = vmul.f32 %v855, %v906
      %v909 = vmul.f32 %v857, %v906
      %v910 = vmul.f32 %v896, %v906
      %v911 = vmul.f32 %v898, %v906
      %v912 = vld [vmem:[%s4] sm:$0xff]
      %914 = vset.pattern.permute.xlu0 0
      %915 = vperm.xlu0 %914, %v912
      %v916 = vpop.permute.xlu0 %915
      %v918 = vadd.f32 %v908, %v916
      %v919 = vadd.f32 %v909, %v916
      %v920 = vadd.f32 %v910, %v916
      %v921 = vadd.f32 %v911, %v916
      %vm922 = vcmp.gt.f32.partialorder %v918, 0.0
      %vm923 = vcmp.gt.f32.partialorder %v919, 0.0
      %vm924 = vcmp.gt.f32.partialorder %v920, 0.0
      %vm925 = vcmp.gt.f32.partialorder %v921, 0.0
      %v926 = vstv %s348
      %v927 = vmul.f32 %v926, %v918
      %v928 = vmul.f32 %v926, %v919
      %v929 = vmul.f32 %v926, %v920
      %v930 = vmul.f32 %v926, %v921
      %v931 = vsel %vm922, %v918, %v927
      %v932 = vsel %vm923, %v919, %v928
      %v933 = vsel %vm924, %v920, %v929
      %v934 = vsel %vm925, %v921, %v930
      %v935 = vld [vmem:[%s6] sm:$0xf]
      %936 = vrot.lane.b32.xlu0 %v931, 17
      %v937 = vpop.permute.xlu0 %936
      %938 = vrot.lane.b32.xlu0 %v932, 17
      %v939 = vpop.permute.xlu0 %938
      %940 = vrot.lane.b32.xlu0 %v933, 17
      %v941 = vpop.permute.xlu0 %940
      %942 = vrot.lane.b32.xlu0 %v934, 17
      %v943 = vpop.permute.xlu0 %942
      %v944 = vsel %vm360, %v941, %v943
      %v945 = vsel %vm360, %v939, %v941
      %v946 = vsel %vm360, %v937, %v939
      %v947 = vsel %vm360, %v943, %v937
      %v948 = vmul.f32 %v947, %v370
      %v949 = vmul.f32 %v946, %v374
      %v950 = vmul.f32 %v945, %v378
      %v951 = vmul.f32 %v944, %v382
      %v952 = vpack.c.bf16 %v948, %v948
      %v953 = vpack.c.bf16 %v949, %v949
      %v954 = vpack.c.bf16 %v950, %v950
      %v955 = vpack.c.bf16 %v951, %v951
      %956 = vrot.lane.b32.xlu0 %v931, 16
      %v957 = vpop.permute.xlu0 %956
      %958 = vrot.lane.b32.xlu0 %v932, 16
      %v959 = vpop.permute.xlu0 %958
      %960 = vrot.lane.b32.xlu0 %v933, 16
      %v961 = vpop.permute.xlu0 %960
      %962 = vrot.lane.b32.xlu0 %v934, 16
      %v963 = vpop.permute.xlu0 %962
      %v964 = vsel %vm403, %v961, %v963
      %v965 = vsel %vm403, %v959, %v961
      %v966 = vsel %vm403, %v957, %v959
      %v967 = vsel %vm403, %v963, %v957
      %v968 = vmul.f32 %v967, %v414
      %v969 = vmul.f32 %v966, %v418
      %v970 = vmul.f32 %v965, %v422
      %v971 = vmul.f32 %v964, %v426
      %v972 = vpack.c.bf16 %v968, %v968
      %v973 = vpack.c.bf16 %v969, %v969
      %v974 = vpack.c.bf16 %v970, %v970
      %v975 = vpack.c.bf16 %v971, %v971
      %976 = vrot.lane.b32.xlu0 %v931, 15
      %v977 = vpop.permute.xlu0 %976
      %978 = vrot.lane.b32.xlu0 %v932, 15
      %v979 = vpop.permute.xlu0 %978
      %980 = vrot.lane.b32.xlu0 %v933, 15
      %v981 = vpop.permute.xlu0 %980
      %982 = vrot.lane.b32.xlu0 %v934, 15
      %v983 = vpop.permute.xlu0 %982
      %v984 = vsel %vm447, %v981, %v983
      %v985 = vsel %vm447, %v979, %v981
      %v986 = vsel %vm447, %v977, %v979
      %v987 = vsel %vm447, %v983, %v977
      %v988 = vmul.f32 %v987, %v458
      %v989 = vmul.f32 %v986, %v462
      %v990 = vmul.f32 %v985, %v466
      %v991 = vmul.f32 %v984, %v470
      %v992 = vpack.c.bf16 %v988, %v988
      %v993 = vpack.c.bf16 %v989, %v989
      %v994 = vpack.c.bf16 %v990, %v990
      %v995 = vpack.c.bf16 %v991, %v991
      %996 = vrot.lane.b32.xlu0 %v931, 1
      %v997 = vpop.permute.xlu0 %996
      %998 = vrot.lane.b32.xlu0 %v932, 1
      %v999 = vpop.permute.xlu0 %998
      %1000 = vrot.lane.b32.xlu0 %v933, 1
      %v1001 = vpop.permute.xlu0 %1000
      %1002 = vrot.lane.b32.xlu0 %v934, 1
      %v1003 = vpop.permute.xlu0 %1002
      %v1004 = vsel %vm491, %v1001, %v1003
      %v1005 = vsel %vm491, %v999, %v1001
      %v1006 = vsel %vm491, %v997, %v999
      %v1007 = vsel %vm491, %v1003, %v997
      %v1008 = vmul.f32 %v1007, %v502
      %v1009 = vmul.f32 %v1006, %v506
      %v1010 = vmul.f32 %v1005, %v510
      %v1011 = vmul.f32 %v1004, %v514
      %v1012 = vpack.c.bf16 %v1008, %v1008
      %v1013 = vpack.c.bf16 %v1009, %v1009
      %v1014 = vpack.c.bf16 %v1010, %v1010
      %v1015 = vpack.c.bf16 %v1011, %v1011
      %v1016 = vpack.c.bf16 %v931, %v931
      %v1017 = vpack.c.bf16 %v932, %v932
      %v1018 = vpack.c.bf16 %v933, %v933
      %v1019 = vpack.c.bf16 %v934, %v934
      %1020 = vrot.lane.b32.xlu0 %v931, 127
      %v1021 = vpop.permute.xlu0 %1020
      %1022 = vrot.lane.b32.xlu0 %v932, 127
      %v1023 = vpop.permute.xlu0 %1022
      %1024 = vrot.lane.b32.xlu0 %v933, 127
      %v1025 = vpop.permute.xlu0 %1024
      %1026 = vrot.lane.b32.xlu0 %v934, 127
      %v1027 = vpop.permute.xlu0 %1026
      %v1028 = vsel %vm539, %v1025, %v1027
      %v1029 = vsel %vm539, %v1023, %v1025
      %v1030 = vsel %vm539, %v1021, %v1023
      %v1031 = vsel %vm539, %v1027, %v1021
      %v1032 = vmul.f32 %v1030, %v550
      %v1033 = vmul.f32 %v1029, %v554
      %v1034 = vmul.f32 %v1028, %v558
      %v1035 = vmul.f32 %v1031, %v562
      %v1036 = vpack.c.bf16 %v1032, %v1032
      %v1037 = vpack.c.bf16 %v1033, %v1033
      %v1038 = vpack.c.bf16 %v1034, %v1034
      %v1039 = vpack.c.bf16 %v1035, %v1035
      %1040 = vrot.lane.b32.xlu0 %v931, 113
      %v1041 = vpop.permute.xlu0 %1040
      %1042 = vrot.lane.b32.xlu0 %v932, 113
      %v1043 = vpop.permute.xlu0 %1042
      %1044 = vrot.lane.b32.xlu0 %v933, 113
      %v1045 = vpop.permute.xlu0 %1044
      %1046 = vrot.lane.b32.xlu0 %v934, 113
      %v1047 = vpop.permute.xlu0 %1046
      %v1048 = vsel %vm583, %v1045, %v1047
      %v1049 = vsel %vm583, %v1043, %v1045
      %v1050 = vsel %vm583, %v1041, %v1043
      %v1051 = vsel %vm583, %v1047, %v1041
      %v1052 = vmul.f32 %v1050, %v594
      %v1053 = vmul.f32 %v1049, %v598
      %v1054 = vmul.f32 %v1048, %v602
      %v1055 = vmul.f32 %v1051, %v606
      %v1056 = vpack.c.bf16 %v1052, %v1052
      %v1057 = vpack.c.bf16 %v1053, %v1053
      %v1058 = vpack.c.bf16 %v1054, %v1054
      %v1059 = vpack.c.bf16 %v1055, %v1055
      %1060 = vrot.lane.b32.xlu0 %v931, 112
      %v1061 = vpop.permute.xlu0 %1060
      %1062 = vrot.lane.b32.xlu0 %v932, 112
      %v1063 = vpop.permute.xlu0 %1062
      %1064 = vrot.lane.b32.xlu0 %v933, 112
      %v1065 = vpop.permute.xlu0 %1064
      %1066 = vrot.lane.b32.xlu0 %v934, 112
      %v1067 = vpop.permute.xlu0 %1066
      %v1068 = vsel %vm627, %v1065, %v1067
      %v1069 = vsel %vm627, %v1063, %v1065
      %v1070 = vsel %vm627, %v1061, %v1063
      %v1071 = vsel %vm627, %v1067, %v1061
      %v1072 = vmul.f32 %v1070, %v638
      %v1073 = vmul.f32 %v1069, %v642
      %v1074 = vmul.f32 %v1068, %v646
      %v1075 = vmul.f32 %v1071, %v650
      %v1076 = vpack.c.bf16 %v1072, %v1072
      %v1077 = vpack.c.bf16 %v1073, %v1073
      %v1078 = vpack.c.bf16 %v1074, %v1074
      %v1079 = vpack.c.bf16 %v1075, %v1075
      %1080 = vrot.lane.b32.xlu0 %v931, 111
      %v1081 = vpop.permute.xlu0 %1080
      %1082 = vrot.lane.b32.xlu0 %v932, 111
      %v1083 = vpop.permute.xlu0 %1082
      %1084 = vrot.lane.b32.xlu0 %v933, 111
      %v1085 = vpop.permute.xlu0 %1084
      %1086 = vrot.lane.b32.xlu0 %v934, 111
      %v1087 = vpop.permute.xlu0 %1086
      %v1088 = vsel %vm671, %v1085, %v1087
      %v1089 = vsel %vm671, %v1083, %v1085
      %v1090 = vsel %vm671, %v1081, %v1083
      %v1091 = vsel %vm671, %v1087, %v1081
      %v1092 = vmul.f32 %v1090, %v682
      %v1093 = vmul.f32 %v1089, %v686
      %v1094 = vmul.f32 %v1088, %v690
      %v1095 = vmul.f32 %v1091, %v694
      %v1096 = vpack.c.bf16 %v1092, %v1092
      %v1097 = vpack.c.bf16 %v1093, %v1093
      %v1098 = vpack.c.bf16 %v1094, %v1094
      %v1099 = vpack.c.bf16 %v1095, %v1095
      %v1104 = vrot.slane %v972, 4
      %v1105 = vrot.slane %v973, 4
      %v1106 = vrot.slane %v974, 4
      %v1107 = vrot.slane %v975, 4
      %v1112 = vrot.slane %v1012, 4
      %v1113 = vrot.slane %v1013, 4
      %v1114 = vrot.slane %v1014, 4
      %v1115 = vrot.slane %v1015, 4
      %v1120 = vrot.slane %v1036, 4
      %v1121 = vrot.slane %v1037, 4
      %v1122 = vrot.slane %v1038, 4
      %v1123 = vrot.slane %v1039, 4
      %v1128 = vrot.slane %v1076, 4
      %v1129 = vrot.slane %v1077, 4
      %v1130 = vrot.slane %v1078, 4
      %v1131 = vrot.slane %v1079, 4
      %v1134 = vsel %vm739, %v952, %v1104
      %v1138 = vsel %vm739, %v953, %v1105
      %v1142 = vsel %vm739, %v954, %v1106
      %v1146 = vsel %vm739, %v955, %v1107
      %v1150 = vsel %vm739, %v992, %v1112
      %v1154 = vsel %vm739, %v993, %v1113
      %v1158 = vsel %vm739, %v994, %v1114
      %v1162 = vsel %vm739, %v995, %v1115
      %v1166 = vsel %vm739, %v1016, %v1120
      %v1170 = vsel %vm739, %v1017, %v1121
      %v1174 = vsel %vm739, %v1018, %v1122
      %v1178 = vsel %vm739, %v1019, %v1123
      %v1182 = vsel %vm739, %v1056, %v1128
      %v1186 = vsel %vm739, %v1057, %v1129
      %v1190 = vsel %vm739, %v1058, %v1130
      %v1194 = vsel %vm739, %v1059, %v1131
      %v1197 = vsel %vm804, %v935, 0
      %v1200 = vsel %vm739, %v1096, 0
      %v1203 = vsel %vm739, %v1097, 0
      %v1206 = vsel %vm739, %v1098, 0
      %v1209 = vsel %vm739, %v1099, 0
      %1211 = vmatprep.subr.bf16.mxu0 %v1138
      %1212 = vmatpush1.bf16.msra.mxu0 %v1134
      %1213 = vmatprep.subr.bf16.mxu0 %v1154
      %1214 = vmatpush1.bf16.msra.mxu0 %v1150
      %1215 = vmatprep.subr.bf16.mxu0 %v1170
      %1216 = vmatpush1.bf16.msra.mxu0 %v1166
      %1217 = vmatprep.subr.bf16.mxu0 %v1186
      %1218 = vmatpush1.bf16.msra.mxu0 %v1182
      %1219 = vmatprep.subr.bf16.mxu0 %v1203
      %1220 = vmatpush1.bf16.msra.mxu0 %v1200
      %1221 = vmatprep.subr.bf16.mxu0 0
      %1222 = vmatpush1.bf16.msra.mxu0 0
      %1223 = vmatprep.subr.bf16.mxu0 0
      %1224 = vmatpush1.bf16.msra.mxu0 0
      %1225 = vmatprep.subr.bf16.mxu0 0
      %1226 = vmatpush1.bf16.msra.mxu0 0
      %1227 = vmatprep.subr.bf16.mxu0 0
      %1228 = vmatpush1.bf16.msra.mxu0 0
      %1229 = vmatprep.subr.bf16.mxu0 0
      %1230 = vmatpush1.bf16.msra.mxu0 0
      %1231 = vmatprep.subr.bf16.mxu0 0
      %1232 = vmatpush1.bf16.msra.mxu0 0
      %1233 = vmatprep.subr.bf16.mxu0 0
      %1234 = vmatpush1.bf16.msra.mxu0 0
      %1235 = vmatprep.subr.bf16.mxu0 0
      %1236 = vmatpush1.bf16.msra.mxu0 0
      %1237 = vmatprep.subr.bf16.mxu0 0
      %1238 = vmatpush1.bf16.msra.mxu0 0
      %1239 = vmatprep.subr.bf16.mxu0 0
      %1240 = vmatpush1.bf16.msra.mxu0 0
      %1241 = vmatprep.subr.bf16.mxu0 0
      %1242 = vmatpush1.bf16.msra.mxu0 0
      %1243 = vmatprep.mubr.bf16.mxu0 0
      %1244 = vmatmul.mubr.bf16.gmra.mrb[0].mxu0 %v1197
      %v1245 = vpop.f32.mrb[0].mxu0
      %v1246 = vadd.f32 0.0, %v1245
      %v1247 = vpop.f32.mrb[0].mxu0
      %v1248 = vadd.f32 0.0, %v1247
      %v1249 = vpop.f32.mrb[0].mxu0
      %v1250 = vpop.f32.mrb[0].mxu0
      %1251 = vdwg.mxu0
      %1252 = vmatprep.subr.bf16.mxu0 %v1146
      %1253 = vmatpush1.bf16.msra.mxu0 %v1142
      %1254 = vmatprep.subr.bf16.mxu0 %v1162
      %1255 = vmatpush1.bf16.msra.mxu0 %v1158
      %1256 = vmatprep.subr.bf16.mxu0 %v1178
      %1257 = vmatpush1.bf16.msra.mxu0 %v1174
      %1258 = vmatprep.subr.bf16.mxu0 %v1194
      %1259 = vmatpush1.bf16.msra.mxu0 %v1190
      %1260 = vmatprep.subr.bf16.mxu0 %v1209
      %1261 = vmatpush1.bf16.msra.mxu0 %v1206
      %1262 = vmatprep.subr.bf16.mxu0 0
      %1263 = vmatpush1.bf16.msra.mxu0 0
      %1264 = vmatprep.subr.bf16.mxu0 0
      %1265 = vmatpush1.bf16.msra.mxu0 0
      %1266 = vmatprep.subr.bf16.mxu0 0
      %1267 = vmatpush1.bf16.msra.mxu0 0
      %1268 = vmatprep.subr.bf16.mxu0 0
      %1269 = vmatpush1.bf16.msra.mxu0 0
      %1270 = vmatprep.subr.bf16.mxu0 0
      %1271 = vmatpush1.bf16.msra.mxu0 0
      %1272 = vmatprep.subr.bf16.mxu0 0
      %1273 = vmatpush1.bf16.msra.mxu0 0
      %1274 = vmatprep.subr.bf16.mxu0 0
      %1275 = vmatpush1.bf16.msra.mxu0 0
      %1276 = vmatprep.subr.bf16.mxu0 0
      %1277 = vmatpush1.bf16.msra.mxu0 0
      %1278 = vmatprep.subr.bf16.mxu0 0
      %1279 = vmatpush1.bf16.msra.mxu0 0
      %1280 = vmatprep.subr.bf16.mxu0 0
      %1281 = vmatpush1.bf16.msra.mxu0 0
      %1282 = vmatprep.subr.bf16.mxu0 0
      %1283 = vmatpush1.bf16.msra.mxu0 0
      %1284 = vmatprep.mubr.bf16.mxu0 0
      %1285 = vmatmul.mubr.bf16.gmra.mrb[0].mxu0 %v1197
      %v1286 = vpop.f32.mrb[0].mxu0
      %v1287 = vadd.f32 0.0, %v1286
      %v1288 = vpop.f32.mrb[0].mxu0
      %v1289 = vadd.f32 0.0, %v1288
      %v1290 = vpop.f32.mrb[0].mxu0
      %v1291 = vpop.f32.mrb[0].mxu0
      %1292 = vdwg.mxu0
      %v1293 = vld [vmem:[%s7] sm:$0xff]
      %1295 = vset.pattern.permute.xlu0 0
      %1296 = vperm.xlu0 %1295, %v1293
      %v1297 = vpop.permute.xlu0 %1296
      %v1299 = vmul.f32 %v1246, %v1297
      %v1300 = vmul.f32 %v1248, %v1297
      %v1301 = vmul.f32 %v1287, %v1297
      %v1302 = vmul.f32 %v1289, %v1297
      %v1303 = vld [vmem:[%s8] sm:$0xff]
      %1305 = vset.pattern.permute.xlu0 0
      %1306 = vperm.xlu0 %1305, %v1303
      %v1307 = vpop.permute.xlu0 %1306
      %v1309 = vadd.f32 %v1299, %v1307
      %v1310 = vadd.f32 %v1300, %v1307
      %v1311 = vadd.f32 %v1301, %v1307
      %v1312 = vadd.f32 %v1302, %v1307
      %v1313 = vadd.f32 %v343, %v1309
      %v1314 = vadd.f32 %v344, %v1310
      %v1315 = vadd.f32 %v346, %v1311
      %v1316 = vadd.f32 %v347, %v1312
      %1317 = vst [vmem:[%s340] sm:$0xff] %v1313
      %1318 = vst [vmem:[%s340 + $0x8] sm:$0xff] %v1314
      %s1319 = scalar_lea.vmem %s340, 16
      %1320 = vst [vmem:[%s1319] sm:$0xff] %v1315
      %1321 = vst [vmem:[%s1319 + $0x8] sm:$0xff] %v1316
      %s1322 = smul.u32 2, %s21
      %p1323 = scmp.lt.s32.totalorder %s1322, 3
      %s1324 = scalar_select %p1323, %s1322, 3
      %s1325 = smul.addr %s1324, 2
      %s1326 = smul.addr %s1325, 8
      %s1327 = scalar_lea.vmem %s9, %s1326
      // Predicated region
      $region57: #{residual_block_pallas.1} parent=55 // pred_check
        %p1328 = pneg %p233
      $region58: #{residual_block_pallas.1} parent=55 // pred_check_branch
        %1330 = sbr.rel (%p1328) target = $region60
      $region59: #{residual_block_pallas.1} parent=55 // pred_region
        %s1331 = smul.u32 2, %s21
      $region60: #{residual_block_pallas.1} parent=55 // pred_fallthru
        _
    $region56: #{residual_block_pallas.1} parent=5 // pred_fallthru
      _
    %p1332 = scmp.le.s32.totalorder 2, %s16
    // Predicated region
    $region61: #{residual_block_pallas.1} parent=5 // pred_check
      %p1333 = pneg %p1332
    $region62: #{residual_block_pallas.1} parent=5 // pred_check_branch
      %1335 = sbr.rel (%p1333) target = $region64
    $region63: #{residual_block_pallas.1} parent=5 // pred_region
      %s1336 = ssub.s32 %s16, 2
      // Predicated region
      $region65: #{residual_block_pallas.1} parent=63 // pred_check
        %p1337 = pneg %p239
      $region66: #{residual_block_pallas.1} parent=63 // pred_check_branch
        %1339 = sbr.rel (%p1337) target = $region68
      $region67: #{residual_block_pallas.1} parent=63 // pred_region
        %s1340 = smul.u32 2, %s22
        %p1341 = scmp.lt.s32.totalorder %s1340, 3
        %s1342 = scalar_select %p1341, %s1340, 3
        %s1343 = smul.addr %s1342, 2
        %s1344 = smul.addr %s1343, 8
        %s1345 = scalar_lea.vmem %s9, %s1344
      $region68: #{residual_block_pallas.1} parent=63 // pred_fallthru
        _
    $region64: #{residual_block_pallas.1} parent=5 // pred_fallthru
      _
  $region6: #{residual_block_pallas.1} parent=0 // loop_footer
    %s20 = sadd.s32 1, %s16
  $region7: #{residual_block_pallas.1} parent=0 // loop_footer_branch
    %15 = sbr.rel target = $region3
  $region8: #{residual_block_pallas.1} parent=0 // loop_exit
    _

</llo_original>
